<compile_context>
chip_gen: v6e
topology: v6e:2x2x1
jax: 0.10.0
libtpu: 0.0.40
codegen_flags: <defaults>
</compile_context>

<pallas_src>
from functools import partial

import jax
import jax.numpy as jnp
from jax.experimental import pallas as pl
from jax.experimental.pallas import tpu as pltpu

BN_EPS = 1e-5
NEG_INF = -1e30


def _classifier_kernel(xm_ref, w1_ref, b1_ref, w2_ref, b2_ref, w3_ref, b3_ref,
                       out_ref):
    # xm: (TM, F) bf16, already top-k-masked and row-padded in the wrapper.
    x = xm_ref[...]

    # fc1 -> relu   (dropout is identity in eval mode)
    h = jnp.dot(x, w1_ref[...],
                preferred_element_type=jnp.float32) + b1_ref[...]
    h = jnp.maximum(h, 0.0)

    # fc2' (= bn1 folded into fc2) -> relu
    h = jnp.dot(h.astype(jnp.bfloat16), w2_ref[...],
                preferred_element_type=jnp.float32) + b2_ref[...]
    h = jnp.maximum(h, 0.0)

    # fc3' (= bn2 folded into fc3, lane-padded to 128) -> log_softmax (f32)
    logits = jnp.dot(h.astype(jnp.bfloat16), w3_ref[...],
                     preferred_element_type=jnp.float32) + b3_ref[...]
    m = jnp.max(logits, axis=-1, keepdims=True)
    z = logits - m
    lse = jnp.log(jnp.sum(jnp.exp(z), axis=-1, keepdims=True))
    out_ref[...] = z - lse


def fold_params(params, c_pad=128):
    """Fold eval-mode BN into the following Linear; pad fc3 to c_pad lanes."""
    W1, b1, bn1, W2, b2, bn2, W3, b3 = params

    def scale_shift(bn):
        g, be, rm, rv = bn[0], bn[1], bn[2], bn[3]
        s = g * jax.lax.rsqrt(rv + BN_EPS)
        return s, be - rm * s

    s1, sh1 = scale_shift(bn1)
    s2, sh2 = scale_shift(bn2)

    W2f = s1[:, None] * W2
    b2f = b2 + sh1[None, :] @ W2          # (1, H2)
    W3f = s2[:, None] * W3
    b3f = b3 + sh2[None, :] @ W3          # (1, C)

    C = W3.shape[1]
    W3p = jnp.pad(W3f, ((0, 0), (0, c_pad - C)))
    b3p = jnp.pad(b3f, ((0, 0), (0, c_pad - C)), constant_values=NEG_INF)

    return (W1.astype(jnp.bfloat16), b1,
            W2f.astype(jnp.bfloat16), b2f,
            W3p.astype(jnp.bfloat16), b3p)


def _choose_tm(batch, max_tm=128):
    """Pick the M tile: round_up(B, 8), and >=2 grid steps for large batch."""
    m8 = ((batch + 7) // 8) * 8
    if m8 <= max_tm:
        return m8, m8                        # single tile, minimal padding
    n_tiles = max(2, (m8 + max_tm - 1) // max_tm)
    tm = (((m8 + n_tiles - 1) // n_tiles + 7) // 8) * 8
    return tm, tm * n_tiles


@partial(jax.jit, static_argnames=("c_out",))
def graph_classifier_forward(data_x, adj_logits, folded_params, c_out):
    """data_x: (B*N, N) node features; adj_logits: (B, N, N)."""
    B, N, _ = adj_logits.shape
    F = N * N
    x = data_x.reshape(B, F)
    absadj = jnp.abs(adj_logits).reshape(B, F)

    k = int(0.3 * N * N)
    # TODO(synk): exact torch.topk index scatter (keep exactly k, index
    # tie-break) has no clean Pallas TPU equivalent; a k-th-largest threshold
    # via jax.lax.top_k is identical for continuous (tie-free) inputs.
    topv, _ = jax.lax.top_k(absadj, k)
    thr = topv[:, k - 1:k]                                   # (B, 1)
    mask = jnp.logical_and(absadj >= thr, absadj > 0.0)
    xm = jnp.where(mask, x, 0.0).astype(jnp.bfloat16)        # bf16 MXU operand

    W1, b1, W2, b2, W3, b3 = folded_params
    F_in, H1 = W1.shape
    H2 = W2.shape[1]
    C_pad = W3.shape[1]

    # Pad batch rows only to the chosen M tile (multiple of 8 sublanes).
    tm, M_pad = _choose_tm(B)
    xm_p = jnp.pad(xm, ((0, M_pad - B), (0, 0)))

    grid = (M_pad // tm,)
    flops = 2 * M_pad * (F_in * H1 + H1 * H2 + H2 * C_pad)
    bytes_accessed = (xm_p.size * 2
                      + (W1.size + W2.size + W3.size) * 2
                      + (b1.size + b2.size + b3.size) * 4
                      + M_pad * C_pad * 4)

    out = pl.pallas_call(
        _classifier_kernel,
        out_shape=jax.ShapeDtypeStruct((M_pad, C_pad), jnp.float32),
        grid_spec=pltpu.PrefetchScalarGridSpec(
            num_scalar_prefetch=0,
            grid=grid,
            in_specs=[
                pl.BlockSpec((tm, F_in), lambda i: (i, 0)),   # masked x tile
                pl.BlockSpec((F_in, H1), lambda i: (0, 0)),   # W1 (resident)
                pl.BlockSpec((1, H1), lambda i: (0, 0)),      # b1
                pl.BlockSpec((H1, H2), lambda i: (0, 0)),     # W2' (bn1 folded)
                pl.BlockSpec((1, H2), lambda i: (0, 0)),      # b2'
                pl.BlockSpec((H2, C_pad), lambda i: (0, 0)),  # W3' (bn2 folded)
                pl.BlockSpec((1, C_pad), lambda i: (0, 0)),   # b3' (pad=-1e30)
            ],
            out_specs=pl.BlockSpec((tm, C_pad), lambda i: (i, 0)),
        ),
        compiler_params=pltpu.CompilerParams(
            dimension_semantics=("parallel",),
            vmem_limit_bytes=8 * 1024 * 1024,
            allow_input_fusion=[True, False, False, False, False, False, False],
        ),
        cost_estimate=pl.CostEstimate(
            flops=flops,
            transcendentals=M_pad * C_pad,
            bytes_accessed=bytes_accessed,
        ),
    )(xm_p, W1, b1, W2, b2, W3, b3)

    return out[:B, :c_out]


def reference_forward(data_x, adj_logits, params):
    """Pure-JAX f32 reference of the original eval-mode forward (BN unfused)."""
    B, N, _ = adj_logits.shape
    F = N * N
    absadj = jnp.abs(adj_logits).reshape(B, F)
    k = int(0.3 * N * N)
    topv, _ = jax.lax.top_k(absadj, k)
    thr = topv[:, k - 1:k]
    mask = jnp.logical_and(absadj >= thr, absadj > 0.0).astype(jnp.float32)
    x = data_x.reshape(B, F) * mask

    W1, b1, bn1, W2, b2, bn2, W3, b3 = params

    def bn(h, p):
        g, be, rm, rv = p[0], p[1], p[2], p[3]
        return (h - rm) / jnp.sqrt(rv + BN_EPS) * g + be

    h = bn(jnp.maximum(x @ W1 + b1, 0.0), bn1)
    h = bn(jnp.maximum(h @ W2 + b2, 0.0), bn2)
    logits = h @ W3 + b3
    return jax.nn.log_softmax(logits, axis=-1)


def init_params(key, f_in, h1, h2, c_out):
    ks = jax.random.split(key, 8)

    def linear(kw, kb, fi, fo):
        w = jax.random.normal(kw, (fi, fo), jnp.float32) / jnp.sqrt(float(fi))
        b = jax.random.normal(kb, (1, fo), jnp.float32) * 0.01
        return w, b

    def bn_params(k, d):
        k1, k2, k3, k4 = jax.random.split(k, 4)
        gamma = jax.random.uniform(k1, (1, d), jnp.float32, 0.5, 1.5)
        beta = jax.random.normal(k2, (1, d), jnp.float32) * 0.1
        rmean = jax.random.normal(k3, (1, d), jnp.float32) * 0.1
        rvar = jax.random.uniform(k4, (1, d), jnp.float32, 0.5, 1.5)
        return jnp.concatenate([gamma, beta, rmean, rvar], axis=0)  # (4, d)

    W1, b1 = linear(ks[0], ks[1], f_in, h1)
    W2, b2 = linear(ks[2], ks[3], h1, h2)
    W3, b3 = linear(ks[4], ks[5], h2, c_out)
    bn1 = bn_params(ks[6], h1)
    bn2 = bn_params(ks[7], h2)
    return (W1, b1, bn1, W2, b2, bn2, W3, b3)


if __name__ == "__main__":
    key = jax.random.PRNGKey(0)
    k_x, k_adj, k_p = jax.random.split(key, 3)

    # Scaled-down config: DIM=64, aggr='cat' -> dim=128, fc1: 2*dim=256 -> 512,
    # fc2: 512 -> 1024, fc3: 1024 -> C. N=16 nodes/graph so N*N = 256 = 2*dim,
    # keeping the hard-coded flatten in the original forward self-consistent.
    B, N = 4, 16
    DIM = 64
    dim = 2 * DIM
    F = N * N
    H1, H2 = 4 * dim, 8 * dim
    C = 8

    data_x = jax.random.normal(k_x, (B * N, N), jnp.float32)       # data.x
    adj_logits = jax.random.normal(k_adj, (B, N, N), jnp.float32)  # adj_logits
    params = init_params(k_p, F, H1, H2, C)
    folded = fold_params(params, c_pad=128)

    out = graph_classifier_forward(data_x, adj_logits, folded, C)
    out = jax.block_until_ready(out)

    ref = reference_forward(data_x, adj_logits, params)
    if out.shape != (B, C):
        raise AssertionError(f"bad output shape {out.shape}")
    if not jnp.allclose(out, ref, rtol=5e-2, atol=5e-2):
        raise AssertionError("Pallas kernel output does not match JAX reference")

    print("KERNEL_OK")
</pallas_src>

<mosaic_0001>
module attributes {stable_mosaic.version = 11 : i64} {
  func.func @_classifier_kernel(%arg0: i32, %arg1: memref<8x256xbf16, #tpu.memory_space<vmem>>, %arg2: memref<256x512xbf16, #tpu.memory_space<vmem>>, %arg3: memref<1x512xf32, #tpu.memory_space<vmem>>, %arg4: memref<512x1024xbf16, #tpu.memory_space<vmem>>, %arg5: memref<1x1024xf32, #tpu.memory_space<vmem>>, %arg6: memref<1024x128xbf16, #tpu.memory_space<vmem>>, %arg7: memref<1x128xf32, #tpu.memory_space<vmem>>, %arg8: memref<8x128xf32, #tpu.memory_space<vmem>>) attributes {dimension_semantics = [#tpu.dimension_semantics<parallel>], iteration_bounds = array<i64: 1>, scalar_prefetch = 0 : i64, scratch_operands = 0 : i64, tpu.core_type = #tpu.core_type<tc>, window_params = [{transform_indices = @transform_0, window_bounds = array<i64: 8, 256>}, {pipeline_mode = #tpu.pipeline_mode<synchronous>, transform_indices = @transform_1, window_bounds = array<i64: 256, 512>}, {pipeline_mode = #tpu.pipeline_mode<synchronous>, transform_indices = @transform_2, window_bounds = array<i64: 1, 512>}, {pipeline_mode = #tpu.pipeline_mode<synchronous>, transform_indices = @transform_3, window_bounds = array<i64: 512, 1024>}, {pipeline_mode = #tpu.pipeline_mode<synchronous>, transform_indices = @transform_4, window_bounds = array<i64: 1, 1024>}, {pipeline_mode = #tpu.pipeline_mode<synchronous>, transform_indices = @transform_5, window_bounds = array<i64: 1024, 128>}, {pipeline_mode = #tpu.pipeline_mode<synchronous>, transform_indices = @transform_6, window_bounds = array<i64: 1, 128>}, {transform_indices = @transform_7, window_bounds = array<i64: 8, 128>}]} {
    %c0 = arith.constant 0 : index
    %c0_0 = arith.constant 0 : index
    %0 = vector.load %arg1[%c0, %c0_0] : memref<8x256xbf16, #tpu.memory_space<vmem>>, vector<8x256xbf16>
    %c0_1 = arith.constant 0 : index
    %c0_2 = arith.constant 0 : index
    %1 = vector.load %arg2[%c0_1, %c0_2] : memref<256x512xbf16, #tpu.memory_space<vmem>>, vector<256x512xbf16>
    %cst = arith.constant dense<0.000000e+00> : vector<8x512xf32>
    %2 = tpu.matmul %0, %1, %cst {dimension_numbers = #tpu.dot_dimension_numbers<[1], [0], [0], [1], [0, 0, 1, 1], [], []>} : vector<8x256xbf16>, vector<256x512xbf16>, vector<8x512xf32> -> vector<8x512xf32>
    %c0_3 = arith.constant 0 : index
    %c0_4 = arith.constant 0 : index
    %3 = vector.load %arg3[%c0_3, %c0_4] : memref<1x512xf32, #tpu.memory_space<vmem>>, vector<1x512xf32>
    %4 = vector.broadcast %3 : vector<1x512xf32> to vector<8x512xf32>
    %5 = arith.addf %2, %4 : vector<8x512xf32>
    %cst_5 = arith.constant 0.000000e+00 : f32
    %6 = vector.broadcast %cst_5 : f32 to vector<8x512xf32>
    %7 = arith.maximumf %5, %6 : vector<8x512xf32>
    %8 = arith.truncf %7 : vector<8x512xf32> to vector<8x512xbf16>
    %c0_6 = arith.constant 0 : index
    %c0_7 = arith.constant 0 : index
    %9 = vector.load %arg4[%c0_6, %c0_7] : memref<512x1024xbf16, #tpu.memory_space<vmem>>, vector<512x1024xbf16>
    %cst_8 = arith.constant dense<0.000000e+00> : vector<8x1024xf32>
    %10 = tpu.matmul %8, %9, %cst_8 {dimension_numbers = #tpu.dot_dimension_numbers<[1], [0], [0], [1], [0, 0, 1, 1], [], []>} : vector<8x512xbf16>, vector<512x1024xbf16>, vector<8x1024xf32> -> vector<8x1024xf32>
    %c0_9 = arith.constant 0 : index
    %c0_10 = arith.constant 0 : index
    %11 = vector.load %arg5[%c0_9, %c0_10] : memref<1x1024xf32, #tpu.memory_space<vmem>>, vector<1x1024xf32>
    %12 = vector.broadcast %11 : vector<1x1024xf32> to vector<8x1024xf32>
    %13 = arith.addf %10, %12 : vector<8x1024xf32>
    %cst_11 = arith.constant 0.000000e+00 : f32
    %14 = vector.broadcast %cst_11 : f32 to vector<8x1024xf32>
    %15 = arith.maximumf %13, %14 : vector<8x1024xf32>
    %16 = arith.truncf %15 : vector<8x1024xf32> to vector<8x1024xbf16>
    %c0_12 = arith.constant 0 : index
    %c0_13 = arith.constant 0 : index
    %17 = vector.load %arg6[%c0_12, %c0_13] : memref<1024x128xbf16, #tpu.memory_space<vmem>>, vector<1024x128xbf16>
    %cst_14 = arith.constant dense<0.000000e+00> : vector<8x128xf32>
    %18 = tpu.matmul %16, %17, %cst_14 {dimension_numbers = #tpu.dot_dimension_numbers<[1], [0], [0], [1], [0, 0, 1, 1], [], []>} : vector<8x1024xbf16>, vector<1024x128xbf16>, vector<8x128xf32> -> vector<8x128xf32>
    %c0_15 = arith.constant 0 : index
    %c0_16 = arith.constant 0 : index
    %19 = vector.load %arg7[%c0_15, %c0_16] : memref<1x128xf32, #tpu.memory_space<vmem>>, vector<1x128xf32>
    %20 = vector.broadcast %19 : vector<1x128xf32> to vector<8x128xf32>
    %21 = arith.addf %18, %20 : vector<8x128xf32>
    %cst_17 = arith.constant dense<0xFF800000> : vector<8xf32>
    %22 = vector.multi_reduction <maximumf>, %21, %cst_17 [1] : vector<8x128xf32> to vector<8xf32>
    %23 = vector.shape_cast %22 : vector<8xf32> to vector<8x1xf32>
    %24 = vector.broadcast %23 : vector<8x1xf32> to vector<8x128xf32>
    %25 = arith.subf %21, %24 : vector<8x128xf32>
    %26 = math.exp %25 : vector<8x128xf32>
    %cst_18 = arith.constant dense<0.000000e+00> : vector<8xf32>
    %27 = vector.multi_reduction <add>, %26, %cst_18 [1] : vector<8x128xf32> to vector<8xf32>
    %28 = vector.shape_cast %27 : vector<8xf32> to vector<8x1xf32>
    %29 = math.log %28 : vector<8x1xf32>
    %30 = vector.broadcast %29 : vector<8x1xf32> to vector<8x128xf32>
    %31 = arith.subf %25, %30 : vector<8x128xf32>
    %c0_19 = arith.constant 0 : index
    %c0_20 = arith.constant 0 : index
    %32 = vector.load %arg8[%c0_19, %c0_20] : memref<8x128xf32, #tpu.memory_space<vmem>>, vector<8x128xf32>
    tpu.vector_store %arg8[%c0_19, %c0_20], %31 {strides = array<i32>} : memref<8x128xf32, #tpu.memory_space<vmem>>, vector<8x128xf32>,
    return
  }
  func.func @transform_0(%arg0: i32) -> (i32, i32) {
    %c0_i32 = arith.constant 0 : i32
    %c0_i32_0 = arith.constant 0 : i32
    return %arg0, %c0_i32 : i32, i32
  }
  func.func @transform_1(%arg0: i32) -> (i32, i32) {
    %c0_i32 = arith.constant 0 : i32
    %c0_i32_0 = arith.constant 0 : i32
    %c0_i32_1 = arith.constant 0 : i32
    return %c0_i32, %c0_i32_0 : i32, i32
  }
  func.func @transform_2(%arg0: i32) -> (i32, i32) {
    %c0_i32 = arith.constant 0 : i32
    %c0_i32_0 = arith.constant 0 : i32
    %c0_i32_1 = arith.constant 0 : i32
    return %c0_i32, %c0_i32_0 : i32, i32
  }
  func.func @transform_3(%arg0: i32) -> (i32, i32) {
    %c0_i32 = arith.constant 0 : i32
    %c0_i32_0 = arith.constant 0 : i32
    %c0_i32_1 = arith.constant 0 : i32
    return %c0_i32, %c0_i32_0 : i32, i32
  }
  func.func @transform_4(%arg0: i32) -> (i32, i32) {
    %c0_i32 = arith.constant 0 : i32
    %c0_i32_0 = arith.constant 0 : i32
    %c0_i32_1 = arith.constant 0 : i32
    return %c0_i32, %c0_i32_0 : i32, i32
  }
  func.func @transform_5(%arg0: i32) -> (i32, i32) {
    %c0_i32 = arith.constant 0 : i32
    %c0_i32_0 = arith.constant 0 : i32
    %c0_i32_1 = arith.constant 0 : i32
    return %c0_i32, %c0_i32_0 : i32, i32
  }
  func.func @transform_6(%arg0: i32) -> (i32, i32) {
    %c0_i32 = arith.constant 0 : i32
    %c0_i32_0 = arith.constant 0 : i32
    %c0_i32_1 = arith.constant 0 : i32
    return %c0_i32, %c0_i32_0 : i32, i32
  }
  func.func @transform_7(%arg0: i32) -> (i32, i32) {
    %c0_i32 = arith.constant 0 : i32
    %c0_i32_0 = arith.constant 0 : i32
    return %arg0, %c0_i32 : i32, i32
  }
}

</mosaic_0001>

<llo_original>
// kernel: graph_classifier_forward.2
$region0: #{graph_classifier_forward.2}
  #allocation0 [shape = 'u32[]', space=smem, size = 0x4, offset = 0x4, fixed_abs, tag = 'smem constant byte address 0x4 - core index']
  #allocation1 [shape = 'u32[144,128]{1,0:T(1,128)}', space=vmem, size = 0x12000, scoped, tag = 'internal scratch']
  #allocation2 [shape = 'u32[2048]{0}', space=vmem, size = 0x2000, scoped, tag = 'scoped memory for graph_classifier_forward.2']
  #allocation3 [shape = 'u32[2048]{0}', space=vmem, size = 0x2000, scoped, tag = 'scoped memory for graph_classifier_forward.2']
  #allocation4 [shape = 'u32[2048]{0}', space=vmem, size = 0x2000, scoped, tag = 'scoped memory for graph_classifier_forward.2']
  #allocation5 [shape = 'u32[2048]{0}', space=vmem, size = 0x2000, scoped, tag = 'scoped memory for graph_classifier_forward.2']
  #allocation6 [shape = 'u32[2048]{0}', space=vmem, size = 0x2000, scoped, tag = 'scoped memory for graph_classifier_forward.2']
  %s0 = inlined_call_operand.hbm [shape: bf16[256,512], index: 0, kind: input, shape index: {}]
  %s1 = inlined_call_operand.vmem [shape: f32[1,512], index: 1, kind: input, shape index: {}]
  %s2 = inlined_call_operand.hbm [shape: bf16[512,1024], index: 2, kind: input, shape index: {}]
  %s3 = inlined_call_operand.vmem [shape: f32[1,1024], index: 3, kind: input, shape index: {}]
  %s4 = inlined_call_operand.hbm [shape: bf16[1024,128], index: 4, kind: input, shape index: {}]
  %s5 = inlined_call_operand.vmem [shape: f32[1,128], index: 5, kind: input, shape index: {}]
  %s6 = inlined_call_operand.vmem [shape: bf16[4,256], index: 6, kind: input, shape index: {}]
  %s7 = inlined_call_operand.<no memory space> [shape: bf16[], index: 7, kind: input, shape index: {}]
  %s8 = inlined_call_operand.vmem [shape: f32[8,128], index: 8, kind: output, shape index: {}]
  %s9 = sld [smem:[#allocation0]]
  $region50: #{graph_classifier_forward.2} parent=0
    _
  %s11 = ssub.s32 1, %s9
  %s12 = scalar_select 0, %s11, %s9
  %v13 = vstv %s7
  %v14 = vunpack.i.l.bf16 %v13
  %v16 = vunpack.i.h.bf16 %v13
  $region1: #{graph_classifier_forward.2} parent=0
    #allocation7 [shape = 'u8[262144]{0}', space=vmem, size = 0x40000, scoped, tag = 'input window, operand 1, single buffered']
    #allocation8 [shape = 's32[1]{0}', space=sflag, size = 0x4, scoped, tag = 'scoped memory for graph_classifier_forward.2']
    #allocation9 [shape = 'u8[1048576]{0}', space=vmem, size = 0x100000, scoped, tag = 'input window, operand 3, single buffered']
    #allocation10 [shape = 's32[1]{0}', space=sflag, size = 0x4, scoped, tag = 'scoped memory for graph_classifier_forward.2']
    #allocation11 [shape = 'u8[262144]{0}', space=vmem, size = 0x40000, scoped, tag = 'input window, operand 5, single buffered']
    #allocation12 [shape = 'u8[4096]{0}', space=vmem, size = 0x1000, dematerialized = true, scoped, tag = 'FusionAdapter Buffer %fusion.1 = bf16[8,256]{1,0:T(8,128)(2,1)} fusion(%param_6.1, %param_7), kind=kLoop, calls=%fused_computation.1.clone, metadata={op_name="jit(graph_classifier_forward)/jit(_pad)/pad" stack_frame_id=16}']
    %18 = vsyncpa [#allocation8], 0
    %19 = vsyncpa [#allocation10], 0
    // Predicated region
    $region2: #{graph_classifier_forward.2} parent=1 // pred_check
      _
    $region3: #{graph_classifier_forward.2} parent=1 // pred_check_branch
      %21 = sbr.rel (0) target = $region5
    $region4: #{graph_classifier_forward.2} parent=1 // pred_region
      _
    $region5: #{graph_classifier_forward.2} parent=1 // pred_fallthru
      _
    // Predicated region
    $region6: #{graph_classifier_forward.2} parent=1 // pred_check
      _
    $region7: #{graph_classifier_forward.2} parent=1 // pred_check_branch
      %23 = sbr.rel (0) target = $region9
    $region8: #{graph_classifier_forward.2} parent=1 // pred_region
      %s25 = ssub.s32 8192, 8192
      %26 = vsyncadd [#allocation8], %s25
      %s27 = sshll.u32 [#allocation7], 4
      %s28 = int_to_ptr.vmem [resolvable:$true] %s27
      %33 = dma.hbm_to_vmem [thread:$0]  %s0, 8192, %s28, [#allocation8], 256, 256, 16
    $region9: #{graph_classifier_forward.2} parent=1 // pred_fallthru
      _
    // Predicated region
    $region10: #{graph_classifier_forward.2} parent=1 // pred_check
      _
    $region11: #{graph_classifier_forward.2} parent=1 // pred_check_branch
      %35 = sbr.rel (0) target = $region13
    $region12: #{graph_classifier_forward.2} parent=1 // pred_region
      _
    $region13: #{graph_classifier_forward.2} parent=1 // pred_fallthru
      _
    // Predicated region
    $region14: #{graph_classifier_forward.2} parent=1 // pred_check
      _
    $region15: #{graph_classifier_forward.2} parent=1 // pred_check_branch
      %37 = sbr.rel (0) target = $region17
    $region16: #{graph_classifier_forward.2} parent=1 // pred_region
      %s39 = ssub.s32 32768, 32768
      %40 = vsyncadd [#allocation10], %s39
      %s41 = sshll.u32 [#allocation9], 4
      %s42 = int_to_ptr.vmem [resolvable:$true] %s41
      %47 = dma.hbm_to_vmem [thread:$0]  %s2, 32768, %s42, [#allocation10], 512, 512, 32
    $region17: #{graph_classifier_forward.2} parent=1 // pred_fallthru
      _
    // Predicated region
    $region18: #{graph_classifier_forward.2} parent=1 // pred_check
      _
    $region19: #{graph_classifier_forward.2} parent=1 // pred_check_branch
      %49 = sbr.rel (0) target = $region21
    $region20: #{graph_classifier_forward.2} parent=1 // pred_region
      _
    $region21: #{graph_classifier_forward.2} parent=1 // pred_fallthru
      _
    // Predicated region
    $region22: #{graph_classifier_forward.2} parent=1 // pred_check
      _
    $region23: #{graph_classifier_forward.2} parent=1 // pred_check_branch
      %51 = sbr.rel (0) target = $region25
    $region24: #{graph_classifier_forward.2} parent=1 // pred_region
      %s53 = ssub.s32 8192, 8192
      %54 = vsyncadd [#allocation10], %s53
      %s55 = sshll.u32 [#allocation11], 4
      %s56 = int_to_ptr.vmem [resolvable:$true] %s55
      %61 = dma.hbm_to_vmem [thread:$0]  %s4, 8192, %s56, [#allocation10], 64, 64, 4
    $region25: #{graph_classifier_forward.2} parent=1 // pred_fallthru
      _
    // Predicated region
    $region26: #{graph_classifier_forward.2} parent=1 // pred_check
      _
    $region27: #{graph_classifier_forward.2} parent=1 // pred_check_branch
      %63 = sbr.rel (0) target = $region29
    $region28: #{graph_classifier_forward.2} parent=1 // pred_region
      _
    $region29: #{graph_classifier_forward.2} parent=1 // pred_fallthru
      _
    // Predicated region
    $region30: #{graph_classifier_forward.2} parent=1 // pred_check
      _
    $region31: #{graph_classifier_forward.2} parent=1 // pred_check_branch
      %65 = sbr.rel (0) target = $region33
    $region32: #{graph_classifier_forward.2} parent=1 // pred_region
      %66 = dma.done [#allocation8], 8192
    $region33: #{graph_classifier_forward.2} parent=1 // pred_fallthru
      _
    // Predicated region
    $region34: #{graph_classifier_forward.2} parent=1 // pred_check
      _
    $region35: #{graph_classifier_forward.2} parent=1 // pred_check_branch
      %68 = sbr.rel (0) target = $region37
    $region36: #{graph_classifier_forward.2} parent=1 // pred_region
      %69 = dma.done [#allocation10], 32768
    $region37: #{graph_classifier_forward.2} parent=1 // pred_fallthru
      _
    // Predicated region
    $region38: #{graph_classifier_forward.2} parent=1 // pred_check
      _
    $region39: #{graph_classifier_forward.2} parent=1 // pred_check_branch
      %71 = sbr.rel (0) target = $region41
    $region40: #{graph_classifier_forward.2} parent=1 // pred_region
      %72 = dma.done [#allocation10], 8192
    $region41: #{graph_classifier_forward.2} parent=1 // pred_fallthru
      _
    %s74 = sor.u32 15, 7
    %s75 = sand.u32 %s74, 5
    %s76 = sshrl.u32 %s75, 1
    %s77 = sor.u32 %s75, %s76
    %s78 = sand.u32 3, %s77
    %v79 = vld [vmem:[%s6] sm:%s78]
    %v80 = vunpack.c.l.bf16 %v79
    %v81 = vunpack.c.h.bf16 %v79
    %v82 = vlaneseq
    %v83 = vshrl.u32 %v82, 7
    %vm85 = vcmp.lt.s32.totalorder %v83, 4
    %v86 = vsel %vm85, %v80, %v14
    %v87 = vpack.c.bf16 0.0, %v86
    %s89 = ssub.s32 16, 1
    %90 = vst [vmem:[#allocation12] sm:%s89] %v87
    %s91 = scalar_lea.vmem %s6, 2
    %s93 = sor.u32 15, 7
    %s94 = sand.u32 %s93, 5
    %s95 = sshrl.u32 %s94, 1
    %s96 = sor.u32 %s94, %s95
    %s97 = sand.u32 3, %s96
    %v98 = vld [vmem:[%s91] sm:%s97]
    %v99 = vunpack.c.l.bf16 %v98
    %v100 = vunpack.c.h.bf16 %v98
    %v101 = vlaneseq
    %v102 = vshrl.u32 %v101, 7
    %vm104 = vcmp.lt.s32.totalorder %v102, 4
    %v105 = vsel %vm104, %v99, %v14
    %s106 = scalar_lea.vmem [#allocation12], 4
    %v107 = vpack.c.bf16 0.0, %v105
    %s109 = ssub.s32 16, 1
    %110 = vst [vmem:[%s106] sm:%s109] %v107
    %v112 = vld [vmem:[#allocation12] sm:$0xff]
    %v113 = vld [vmem:[#allocation7] sm:$0xff]
    %v114 = vld [vmem:[#allocation7 + $0x8] sm:$0xff]
    %v115 = vld [vmem:[#allocation7 + $0x10] sm:$0xff]
    %v116 = vld [vmem:[#allocation7 + $0x18] sm:$0xff]
    %v117 = vld [vmem:[#allocation7 + $0x20] sm:$0xff]
    %v118 = vld [vmem:[#allocation7 + $0x28] sm:$0xff]
    %v119 = vld [vmem:[#allocation7 + $0x30] sm:$0xff]
    %v120 = vld [vmem:[#allocation7 + $0x38] sm:$0xff]
    %v121 = vld [vmem:[#allocation7 + $0x40] sm:$0xff]
    %v122 = vld [vmem:[#allocation7 + $0x48] sm:$0xff]
    %v123 = vld [vmem:[#allocation7 + $0x50] sm:$0xff]
    %v124 = vld [vmem:[#allocation7 + $0x58] sm:$0xff]
    %v125 = vld [vmem:[#allocation7 + $0x60] sm:$0xff]
    %v126 = vld [vmem:[#allocation7 + $0x68] sm:$0xff]
    %v127 = vld [vmem:[#allocation7 + $0x70] sm:$0xff]
    %v128 = vld [vmem:[#allocation7 + $0x78] sm:$0xff]
    %v129 = vld [vmem:[#allocation7 + $0x80] sm:$0xff]
    %v130 = vld [vmem:[#allocation7 + $0x88] sm:$0xff]
    %v131 = vld [vmem:[#allocation7 + $0x90] sm:$0xff]
    %v132 = vld [vmem:[#allocation7 + $0x98] sm:$0xff]
    %v133 = vld [vmem:[#allocation7 + $0xa0] sm:$0xff]
    %v134 = vld [vmem:[#allocation7 + $0xa8] sm:$0xff]
    %v135 = vld [vmem:[#allocation7 + $0xb0] sm:$0xff]
    %v136 = vld [vmem:[#allocation7 + $0xb8] sm:$0xff]
    %v137 = vld [vmem:[#allocation7 + $0xc0] sm:$0xff]
    %v138 = vld [vmem:[#allocation7 + $0xc8] sm:$0xff]
    %v139 = vld [vmem:[#allocation7 + $0xd0] sm:$0xff]
    %v140 = vld [vmem:[#allocation7 + $0xd8] sm:$0xff]
    %v141 = vld [vmem:[#allocation7 + $0xe0] sm:$0xff]
    %v142 = vld [vmem:[#allocation7 + $0xe8] sm:$0xff]
    %v143 = vld [vmem:[#allocation7 + $0xf0] sm:$0xff]
    %v144 = vld [vmem:[#allocation7 + $0xf8] sm:$0xff]
    %v145 = vld [vmem:[#allocation7 + $0x100] sm:$0xff]
    %v146 = vld [vmem:[#allocation7 + $0x108] sm:$0xff]
    %v147 = vld [vmem:[#allocation7 + $0x110] sm:$0xff]
    %v148 = vld [vmem:[#allocation7 + $0x118] sm:$0xff]
    %v149 = vld [vmem:[#allocation7 + $0x120] sm:$0xff]
    %v150 = vld [vmem:[#allocation7 + $0x128] sm:$0xff]
    %v151 = vld [vmem:[#allocation7 + $0x130] sm:$0xff]
    %v152 = vld [vmem:[#allocation7 + $0x138] sm:$0xff]
    %v153 = vld [vmem:[#allocation7 + $0x140] sm:$0xff]
    %v154 = vld [vmem:[#allocation7 + $0x148] sm:$0xff]
    %v155 = vld [vmem:[#allocation7 + $0x150] sm:$0xff]
    %v156 = vld [vmem:[#allocation7 + $0x158] sm:$0xff]
    %v157 = vld [vmem:[#allocation7 + $0x160] sm:$0xff]
    %v158 = vld [vmem:[#allocation7 + $0x168] sm:$0xff]
    %v159 = vld [vmem:[#allocation7 + $0x170] sm:$0xff]
    %v160 = vld [vmem:[#allocation7 + $0x178] sm:$0xff]
    %v161 = vld [vmem:[#allocation7 + $0x180] sm:$0xff]
    %v162 = vld [vmem:[#allocation7 + $0x188] sm:$0xff]
    %v163 = vld [vmem:[#allocation7 + $0x190] sm:$0xff]
    %v164 = vld [vmem:[#allocation7 + $0x198] sm:$0xff]
    %v165 = vld [vmem:[#allocation7 + $0x1a0] sm:$0xff]
    %v166 = vld [vmem:[#allocation7 + $0x1a8] sm:$0xff]
    %v167 = vld [vmem:[#allocation7 + $0x1b0] sm:$0xff]
    %v168 = vld [vmem:[#allocation7 + $0x1b8] sm:$0xff]
    %v169 = vld [vmem:[#allocation7 + $0x1c0] sm:$0xff]
    %v170 = vld [vmem:[#allocation7 + $0x1c8] sm:$0xff]
    %v171 = vld [vmem:[#allocation7 + $0x1d0] sm:$0xff]
    %v172 = vld [vmem:[#allocation7 + $0x1d8] sm:$0xff]
    %v173 = vld [vmem:[#allocation7 + $0x1e0] sm:$0xff]
    %v174 = vld [vmem:[#allocation7 + $0x1e8] sm:$0xff]
    %v175 = vld [vmem:[#allocation7 + $0x1f0] sm:$0xff]
    %v176 = vld [vmem:[#allocation7 + $0x1f8] sm:$0xff]
    %v177 = vld [vmem:[%s1] sm:$0xf]
    %v179 = vlaneseq
    %v180 = vshrl.u32 %v179, 7
    %v181 = vsub.s32 0, %v180
    %v182 = vrot.slane %v177, %v181
    %v183 = vlaneseq
    %v184 = vshrl.u32 %v183, 7
    %v185 = vsub.s32 1, %v184
    %v186 = vrot.slane %v177, %v185
    %v187 = vlaneseq
    %v188 = vshrl.u32 %v187, 7
    %v189 = vsub.s32 2, %v188
    %v190 = vrot.slane %v177, %v189
    %v191 = vlaneseq
    %v192 = vshrl.u32 %v191, 7
    %v193 = vsub.s32 3, %v192
    %v194 = vrot.slane %v177, %v193
    %v200 = vunpack.c.l.b16 %v112
    %v201 = vunpack.c.h.b16 %v112
    %v202 = vpack.c.b16 %v200, %v200
    %v203 = vpack.c.b16 %v201, %v201
    %v270 = vunpack.c.l.b16 %v113
    %v271 = vunpack.c.h.b16 %v113
    %v272 = vunpack.c.l.b16 %v114
    %v273 = vunpack.c.h.b16 %v114
    %v274 = vunpack.c.l.b16 %v115
    %v275 = vunpack.c.h.b16 %v115
    %v276 = vunpack.c.l.b16 %v116
    %v277 = vunpack.c.h.b16 %v116
    %v278 = vunpack.c.l.b16 %v117
    %v279 = vunpack.c.h.b16 %v117
    %v280 = vunpack.c.l.b16 %v118
    %v281 = vunpack.c.h.b16 %v118
    %v282 = vunpack.c.l.b16 %v119
    %v283 = vunpack.c.h.b16 %v119
    %v284 = vunpack.c.l.b16 %v120
    %v285 = vunpack.c.h.b16 %v120
    %v286 = vunpack.c.l.b16 %v121
    %v287 = vunpack.c.h.b16 %v121
    %v288 = vunpack.c.l.b16 %v122
    %v289 = vunpack.c.h.b16 %v122
    %v290 = vunpack.c.l.b16 %v123
    %v291 = vunpack.c.h.b16 %v123
    %v292 = vunpack.c.l.b16 %v124
    %v293 = vunpack.c.h.b16 %v124
    %v294 = vunpack.c.l.b16 %v125
    %v295 = vunpack.c.h.b16 %v125
    %v296 = vunpack.c.l.b16 %v126
    %v297 = vunpack.c.h.b16 %v126
    %v298 = vunpack.c.l.b16 %v127
    %v299 = vunpack.c.h.b16 %v127
    %v300 = vunpack.c.l.b16 %v128
    %v301 = vunpack.c.h.b16 %v128
    %v302 = vunpack.c.l.b16 %v129
    %v303 = vunpack.c.h.b16 %v129
    %v304 = vunpack.c.l.b16 %v130
    %v305 = vunpack.c.h.b16 %v130
    %v306 = vunpack.c.l.b16 %v131
    %v307 = vunpack.c.h.b16 %v131
    %v308 = vunpack.c.l.b16 %v132
    %v309 = vunpack.c.h.b16 %v132
    %v310 = vunpack.c.l.b16 %v133
    %v311 = vunpack.c.h.b16 %v133
    %v312 = vunpack.c.l.b16 %v134
    %v313 = vunpack.c.h.b16 %v134
    %v314 = vunpack.c.l.b16 %v135
    %v315 = vunpack.c.h.b16 %v135
    %v316 = vunpack.c.l.b16 %v136
    %v317 = vunpack.c.h.b16 %v136
    %v318 = vunpack.c.l.b16 %v137
    %v319 = vunpack.c.h.b16 %v137
    %v320 = vunpack.c.l.b16 %v138
    %v321 = vunpack.c.h.b16 %v138
    %v322 = vunpack.c.l.b16 %v139
    %v323 = vunpack.c.h.b16 %v139
    %v324 = vunpack.c.l.b16 %v140
    %v325 = vunpack.c.h.b16 %v140
    %v326 = vunpack.c.l.b16 %v141
    %v327 = vunpack.c.h.b16 %v141
    %v328 = vunpack.c.l.b16 %v142
    %v329 = vunpack.c.h.b16 %v142
    %v330 = vunpack.c.l.b16 %v143
    %v331 = vunpack.c.h.b16 %v143
    %v332 = vunpack.c.l.b16 %v144
    %v333 = vunpack.c.h.b16 %v144
    %v334 = vunpack.c.l.b16 %v145
    %v335 = vunpack.c.h.b16 %v145
    %v336 = vunpack.c.l.b16 %v146
    %v337 = vunpack.c.h.b16 %v146
    %v338 = vunpack.c.l.b16 %v147
    %v339 = vunpack.c.h.b16 %v147
    %v340 = vunpack.c.l.b16 %v148
    %v341 = vunpack.c.h.b16 %v148
    %v342 = vunpack.c.l.b16 %v149
    %v343 = vunpack.c.h.b16 %v149
    %v344 = vunpack.c.l.b16 %v150
    %v345 = vunpack.c.h.b16 %v150
    %v346 = vunpack.c.l.b16 %v151
    %v347 = vunpack.c.h.b16 %v151
    %v348 = vunpack.c.l.b16 %v152
    %v349 = vunpack.c.h.b16 %v152
    %v350 = vunpack.c.l.b16 %v153
    %v351 = vunpack.c.h.b16 %v153
    %v352 = vunpack.c.l.b16 %v154
    %v353 = vunpack.c.h.b16 %v154
    %v354 = vunpack.c.l.b16 %v155
    %v355 = vunpack.c.h.b16 %v155
    %v356 = vunpack.c.l.b16 %v156
    %v357 = vunpack.c.h.b16 %v156
    %v358 = vunpack.c.l.b16 %v157
    %v359 = vunpack.c.h.b16 %v157
    %v360 = vunpack.c.l.b16 %v158
    %v361 = vunpack.c.h.b16 %v158
    %v362 = vunpack.c.l.b16 %v159
    %v363 = vunpack.c.h.b16 %v159
    %v364 = vunpack.c.l.b16 %v160
    %v365 = vunpack.c.h.b16 %v160
    %v366 = vunpack.c.l.b16 %v161
    %v367 = vunpack.c.h.b16 %v161
    %v368 = vunpack.c.l.b16 %v162
    %v369 = vunpack.c.h.b16 %v162
    %v370 = vunpack.c.l.b16 %v163
    %v371 = vunpack.c.h.b16 %v163
    %v372 = vunpack.c.l.b16 %v164
    %v373 = vunpack.c.h.b16 %v164
    %v374 = vunpack.c.l.b16 %v165
    %v375 = vunpack.c.h.b16 %v165
    %v376 = vunpack.c.l.b16 %v166
    %v377 = vunpack.c.h.b16 %v166
    %v378 = vunpack.c.l.b16 %v167
    %v379 = vunpack.c.h.b16 %v167
    %v380 = vunpack.c.l.b16 %v168
    %v381 = vunpack.c.h.b16 %v168
    %v382 = vunpack.c.l.b16 %v169
    %v383 = vunpack.c.h.b16 %v169
    %v384 = vunpack.c.l.b16 %v170
    %v385 = vunpack.c.h.b16 %v170
    %v386 = vunpack.c.l.b16 %v171
    %v387 = vunpack.c.h.b16 %v171
    %v388 = vunpack.c.l.b16 %v172
    %v389 = vunpack.c.h.b16 %v172
    %v390 = vunpack.c.l.b16 %v173
    %v391 = vunpack.c.h.b16 %v173
    %v392 = vunpack.c.l.b16 %v174
    %v393 = vunpack.c.h.b16 %v174
    %v394 = vunpack.c.l.b16 %v175
    %v395 = vunpack.c.h.b16 %v175
    %v396 = vunpack.c.l.b16 %v176
    %v397 = vunpack.c.h.b16 %v176
    %v398 = vpack.c.b16 %v274, %v270
    %v399 = vpack.c.b16 %v275, %v271
    %v400 = vpack.c.b16 %v276, %v272
    %v401 = vpack.c.b16 %v277, %v273
    %v402 = vpack.c.b16 %v282, %v278
    %v403 = vpack.c.b16 %v283, %v279
    %v404 = vpack.c.b16 %v284, %v280
    %v405 = vpack.c.b16 %v285, %v281
    %v406 = vpack.c.b16 %v290, %v286
    %v407 = vpack.c.b16 %v291, %v287
    %v408 = vpack.c.b16 %v292, %v288
    %v409 = vpack.c.b16 %v293, %v289
    %v410 = vpack.c.b16 %v298, %v294
    %v411 = vpack.c.b16 %v299, %v295
    %v412 = vpack.c.b16 %v300, %v296
    %v413 = vpack.c.b16 %v301, %v297
    %v414 = vpack.c.b16 %v306, %v302
    %v415 = vpack.c.b16 %v307, %v303
    %v416 = vpack.c.b16 %v308, %v304
    %v417 = vpack.c.b16 %v309, %v305
    %v418 = vpack.c.b16 %v314, %v310
    %v419 = vpack.c.b16 %v315, %v311
    %v420 = vpack.c.b16 %v316, %v312
    %v421 = vpack.c.b16 %v317, %v313
    %v422 = vpack.c.b16 %v322, %v318
    %v423 = vpack.c.b16 %v323, %v319
    %v424 = vpack.c.b16 %v324, %v320
    %v425 = vpack.c.b16 %v325, %v321
    %v426 = vpack.c.b16 %v330, %v326
    %v427 = vpack.c.b16 %v331, %v327
    %v428 = vpack.c.b16 %v332, %v328
    %v429 = vpack.c.b16 %v333, %v329
    %v430 = vpack.c.b16 %v338, %v334
    %v431 = vpack.c.b16 %v339, %v335
    %v432 = vpack.c.b16 %v340, %v336
    %v433 = vpack.c.b16 %v341, %v337
    %v434 = vpack.c.b16 %v346, %v342
    %v435 = vpack.c.b16 %v347, %v343
    %v436 = vpack.c.b16 %v348, %v344
    %v437 = vpack.c.b16 %v349, %v345
    %v438 = vpack.c.b16 %v354, %v350
    %v439 = vpack.c.b16 %v355, %v351
    %v440 = vpack.c.b16 %v356, %v352
    %v441 = vpack.c.b16 %v357, %v353
    %v442 = vpack.c.b16 %v362, %v358
    %v443 = vpack.c.b16 %v363, %v359
    %v444 = vpack.c.b16 %v364, %v360
    %v445 = vpack.c.b16 %v365, %v361
    %v446 = vpack.c.b16 %v370, %v366
    %v447 = vpack.c.b16 %v371, %v367
    %v448 = vpack.c.b16 %v372, %v368
    %v449 = vpack.c.b16 %v373, %v369
    %v450 = vpack.c.b16 %v378, %v374
    %v451 = vpack.c.b16 %v379, %v375
    %v452 = vpack.c.b16 %v380, %v376
    %v453 = vpack.c.b16 %v381, %v377
    %v454 = vpack.c.b16 %v386, %v382
    %v455 = vpack.c.b16 %v387, %v383
    %v456 = vpack.c.b16 %v388, %v384
    %v457 = vpack.c.b16 %v389, %v385
    %v458 = vpack.c.b16 %v394, %v390
    %v459 = vpack.c.b16 %v395, %v391
    %v460 = vpack.c.b16 %v396, %v392
    %v461 = vpack.c.b16 %v397, %v393
    %526 = vmatprep.subr.bf16.mxu0 %v427
    %527 = vmatpush1.bf16.msra.mxu0 %v426
    %528 = vmatprep.subr.bf16.mxu0 %v423
    %529 = vmatpush1.bf16.msra.mxu0 %v422
    %530 = vmatprep.subr.bf16.mxu0 %v419
    %531 = vmatpush1.bf16.msra.mxu0 %v418
    %532 = vmatprep.subr.bf16.mxu0 %v415
    %533 = vmatpush1.bf16.msra.mxu0 %v414
    %534 = vmatprep.subr.bf16.mxu0 %v411
    %535 = vmatpush1.bf16.msra.mxu0 %v410
    %536 = vmatprep.subr.bf16.mxu0 %v407
    %537 = vmatpush1.bf16.msra.mxu0 %v406
    %538 = vmatprep.subr.bf16.mxu0 %v403
    %539 = vmatpush1.bf16.msra.mxu0 %v402
    %540 = vmatprep.subr.bf16.mxu0 %v399
    %541 = vmatpush1.bf16.msra.mxu0 %v398
    %542 = vmatprep.subr.bf16.mxu0 %v459
    %543 = vmatpush2.bf16.msra.mxu0 %v458
    %544 = vmatprep.subr.bf16.mxu0 %v455
    %545 = vmatpush2.bf16.msra.mxu0 %v454
    %546 = vmatprep.subr.bf16.mxu0 %v451
    %547 = vmatpush2.bf16.msra.mxu0 %v450
    %548 = vmatprep.subr.bf16.mxu0 %v447
    %549 = vmatpush2.bf16.msra.mxu0 %v446
    %550 = vmatprep.subr.bf16.mxu0 %v443
    %551 = vmatpush2.bf16.msra.mxu0 %v442
    %552 = vmatprep.subr.bf16.mxu0 %v439
    %553 = vmatpush2.bf16.msra.mxu0 %v438
    %554 = vmatprep.subr.bf16.mxu0 %v435
    %555 = vmatpush2.bf16.msra.mxu0 %v434
    %556 = vmatprep.subr.bf16.mxu0 %v431
    %557 = vmatpush2.bf16.msra.mxu0 %v430
    %558 = vmatprep.mubr.bf16.mxu0 %v203
    %559 = vmatmul.mubr.bf16.gmra.mxu0 %v202
    %v560 = vpop.f32.mrf.mxu0
    %v561 = vadd.f32 %v182, %v560
    %v562 = vpop.f32.mrf.mxu0
    %v563 = vadd.f32 %v186, %v562
    %v564 = vpop.f32.mrf.mxu0
    %v565 = vpop.f32.mrf.mxu0
    %566 = vdwg.mxu0
    %567 = vmatprep.subr.bf16.mxu0 %v429
    %568 = vmatpush1.bf16.msra.mxu0 %v428
    %569 = vmatprep.subr.bf16.mxu0 %v425
    %570 = vmatpush1.bf16.msra.mxu0 %v424
    %571 = vmatprep.subr.bf16.mxu0 %v421
    %572 = vmatpush1.bf16.msra.mxu0 %v420
    %573 = vmatprep.subr.bf16.mxu0 %v417
    %574 = vmatpush1.bf16.msra.mxu0 %v416
    %575 = vmatprep.subr.bf16.mxu0 %v413
    %576 = vmatpush1.bf16.msra.mxu0 %v412
    %577 = vmatprep.subr.bf16.mxu0 %v409
    %578 = vmatpush1.bf16.msra.mxu0 %v408
    %579 = vmatprep.subr.bf16.mxu0 %v405
    %580 = vmatpush1.bf16.msra.mxu0 %v404
    %581 = vmatprep.subr.bf16.mxu0 %v401
    %582 = vmatpush1.bf16.msra.mxu0 %v400
    %583 = vmatprep.subr.bf16.mxu0 %v461
    %584 = vmatpush2.bf16.msra.mxu0 %v460
    %585 = vmatprep.subr.bf16.mxu0 %v457
    %586 = vmatpush2.bf16.msra.mxu0 %v456
    %587 = vmatprep.subr.bf16.mxu0 %v453
    %588 = vmatpush2.bf16.msra.mxu0 %v452
    %589 = vmatprep.subr.bf16.mxu0 %v449
    %590 = vmatpush2.bf16.msra.mxu0 %v448
    %591 = vmatprep.subr.bf16.mxu0 %v445
    %592 = vmatpush2.bf16.msra.mxu0 %v444
    %593 = vmatprep.subr.bf16.mxu0 %v441
    %594 = vmatpush2.bf16.msra.mxu0 %v440
    %595 = vmatprep.subr.bf16.mxu0 %v437
    %596 = vmatpush2.bf16.msra.mxu0 %v436
    %597 = vmatprep.subr.bf16.mxu0 %v433
    %598 = vmatpush2.bf16.msra.mxu0 %v432
    %599 = vmatprep.mubr.bf16.mxu0 %v203
    %600 = vmatmul.mubr.bf16.gmra.mxu0 %v202
    %v601 = vpop.f32.mrf.mxu0
    %v602 = vadd.f32 %v190, %v601
    %v603 = vpop.f32.mrf.mxu0
    %v604 = vadd.f32 %v194, %v603
    %v605 = vpop.f32.mrf.mxu0
    %v606 = vpop.f32.mrf.mxu0
    %607 = vdwg.mxu0
    %v608 = vmax.f32 %v561, 0.0
    %v609 = vmax.f32 %v563, 0.0
    %v610 = vmax.f32 %v602, 0.0
    %v611 = vmax.f32 %v604, 0.0
    %v612 = vpack.c.bf16 %v608, %v608
    %v613 = vpack.c.bf16 %v609, %v609
    %v614 = vpack.c.bf16 %v610, %v610
    %v615 = vpack.c.bf16 %v611, %v611
    %v616 = vld [vmem:[#allocation9] sm:$0xff]
    %v617 = vld [vmem:[#allocation9 + $0x8] sm:$0xff]
    %v618 = vld [vmem:[#allocation9 + $0x10] sm:$0xff]
    %v619 = vld [vmem:[#allocation9 + $0x18] sm:$0xff]
    %v620 = vld [vmem:[#allocation9 + $0x20] sm:$0xff]
    %v621 = vld [vmem:[#allocation9 + $0x28] sm:$0xff]
    %v622 = vld [vmem:[#allocation9 + $0x30] sm:$0xff]
    %v623 = vld [vmem:[#allocation9 + $0x38] sm:$0xff]
    %v624 = vld [vmem:[#allocation9 + $0x40] sm:$0xff]
    %v625 = vld [vmem:[#allocation9 + $0x48] sm:$0xff]
    %v626 = vld [vmem:[#allocation9 + $0x50] sm:$0xff]
    %v627 = vld [vmem:[#allocation9 + $0x58] sm:$0xff]
    %v628 = vld [vmem:[#allocation9 + $0x60] sm:$0xff]
    %v629 = vld [vmem:[#allocation9 + $0x68] sm:$0xff]
    %v630 = vld [vmem:[#allocation9 + $0x70] sm:$0xff]
    %v631 = vld [vmem:[#allocation9 + $0x78] sm:$0xff]
    %v632 = vld [vmem:[#allocation9 + $0x80] sm:$0xff]
    %v633 = vld [vmem:[#allocation9 + $0x88] sm:$0xff]
    %v634 = vld [vmem:[#allocation9 + $0x90] sm:$0xff]
    %v635 = vld [vmem:[#allocation9 + $0x98] sm:$0xff]
    %v636 = vld [vmem:[#allocation9 + $0xa0] sm:$0xff]
    %v637 = vld [vmem:[#allocation9 + $0xa8] sm:$0xff]
    %v638 = vld [vmem:[#allocation9 + $0xb0] sm:$0xff]
    %v639 = vld [vmem:[#allocation9 + $0xb8] sm:$0xff]
    %v640 = vld [vmem:[#allocation9 + $0xc0] sm:$0xff]
    %v641 = vld [vmem:[#allocation9 + $0xc8] sm:$0xff]
    %v642 = vld [vmem:[#allocation9 + $0xd0] sm:$0xff]
    %v643 = vld [vmem:[#allocation9 + $0xd8] sm:$0xff]
    %v644 = vld [vmem:[#allocation9 + $0xe0] sm:$0xff]
    %v645 = vld [vmem:[#allocation9 + $0xe8] sm:$0xff]
    %v646 = vld [vmem:[#allocation9 + $0xf0] sm:$0xff]
    %v647 = vld [vmem:[#allocation9 + $0xf8] sm:$0xff]
    %v648 = vld [vmem:[#allocation9 + $0x100] sm:$0xff]
    %v649 = vld [vmem:[#allocation9 + $0x108] sm:$0xff]
    %v650 = vld [vmem:[#allocation9 + $0x110] sm:$0xff]
    %v651 = vld [vmem:[#allocation9 + $0x118] sm:$0xff]
    %v652 = vld [vmem:[#allocation9 + $0x120] sm:$0xff]
    %v653 = vld [vmem:[#allocation9 + $0x128] sm:$0xff]
    %v654 = vld [vmem:[#allocation9 + $0x130] sm:$0xff]
    %v655 = vld [vmem:[#allocation9 + $0x138] sm:$0xff]
    %v656 = vld [vmem:[#allocation9 + $0x140] sm:$0xff]
    %v657 = vld [vmem:[#allocation9 + $0x148] sm:$0xff]
    %v658 = vld [vmem:[#allocation9 + $0x150] sm:$0xff]
    %v659 = vld [vmem:[#allocation9 + $0x158] sm:$0xff]
    %v660 = vld [vmem:[#allocation9 + $0x160] sm:$0xff]
    %v661 = vld [vmem:[#allocation9 + $0x168] sm:$0xff]
    %v662 = vld [vmem:[#allocation9 + $0x170] sm:$0xff]
    %v663 = vld [vmem:[#allocation9 + $0x178] sm:$0xff]
    %v664 = vld [vmem:[#allocation9 + $0x180] sm:$0xff]
    %v665 = vld [vmem:[#allocation9 + $0x188] sm:$0xff]
    %v666 = vld [vmem:[#allocation9 + $0x190] sm:$0xff]
    %v667 = vld [vmem:[#allocation9 + $0x198] sm:$0xff]
    %v668 = vld [vmem:[#allocation9 + $0x1a0] sm:$0xff]
    %v669 = vld [vmem:[#allocation9 + $0x1a8] sm:$0xff]
    %v670 = vld [vmem:[#allocation9 + $0x1b0] sm:$0xff]
    %v671 = vld [vmem:[#allocation9 + $0x1b8] sm:$0xff]
    %v672 = vld [vmem:[#allocation9 + $0x1c0] sm:$0xff]
    %v673 = vld [vmem:[#allocation9 + $0x1c8] sm:$0xff]
    %v674 = vld [vmem:[#allocation9 + $0x1d0] sm:$0xff]
    %v675 = vld [vmem:[#allocation9 + $0x1d8] sm:$0xff]
    %v676 = vld [vmem:[#allocation9 + $0x1e0] sm:$0xff]
    %v677 = vld [vmem:[#allocation9 + $0x1e8] sm:$0xff]
    %v678 = vld [vmem:[#allocation9 + $0x1f0] sm:$0xff]
    %v679 = vld [vmem:[#allocation9 + $0x1f8] sm:$0xff]
    %v680 = vld [vmem:[#allocation9 + $0x200] sm:$0xff]
    %v681 = vld [vmem:[#allocation9 + $0x208] sm:$0xff]
    %v682 = vld [vmem:[#allocation9 + $0x210] sm:$0xff]
    %v683 = vld [vmem:[#allocation9 + $0x218] sm:$0xff]
    %v684 = vld [vmem:[#allocation9 + $0x220] sm:$0xff]
    %v685 = vld [vmem:[#allocation9 + $0x228] sm:$0xff]
    %v686 = vld [vmem:[#allocation9 + $0x230] sm:$0xff]
    %v687 = vld [vmem:[#allocation9 + $0x238] sm:$0xff]
    %v688 = vld [vmem:[#allocation9 + $0x240] sm:$0xff]
    %v689 = vld [vmem:[#allocation9 + $0x248] sm:$0xff]
    %v690 = vld [vmem:[#allocation9 + $0x250] sm:$0xff]
    %v691 = vld [vmem:[#allocation9 + $0x258] sm:$0xff]
    %v692 = vld [vmem:[#allocation9 + $0x260] sm:$0xff]
    %v693 = vld [vmem:[#allocation9 + $0x268] sm:$0xff]
    %v694 = vld [vmem:[#allocation9 + $0x270] sm:$0xff]
    %v695 = vld [vmem:[#allocation9 + $0x278] sm:$0xff]
    %v696 = vld [vmem:[#allocation9 + $0x280] sm:$0xff]
    %v697 = vld [vmem:[#allocation9 + $0x288] sm:$0xff]
    %v698 = vld [vmem:[#allocation9 + $0x290] sm:$0xff]
    %v699 = vld [vmem:[#allocation9 + $0x298] sm:$0xff]
    %v700 = vld [vmem:[#allocation9 + $0x2a0] sm:$0xff]
    %v701 = vld [vmem:[#allocation9 + $0x2a8] sm:$0xff]
    %v702 = vld [vmem:[#allocation9 + $0x2b0] sm:$0xff]
    %v703 = vld [vmem:[#allocation9 + $0x2b8] sm:$0xff]
    %v704 = vld [vmem:[#allocation9 + $0x2c0] sm:$0xff]
    %v705 = vld [vmem:[#allocation9 + $0x2c8] sm:$0xff]
    %v706 = vld [vmem:[#allocation9 + $0x2d0] sm:$0xff]
    %v707 = vld [vmem:[#allocation9 + $0x2d8] sm:$0xff]
    %v708 = vld [vmem:[#allocation9 + $0x2e0] sm:$0xff]
    %v709 = vld [vmem:[#allocation9 + $0x2e8] sm:$0xff]
    %v710 = vld [vmem:[#allocation9 + $0x2f0] sm:$0xff]
    %v711 = vld [vmem:[#allocation9 + $0x2f8] sm:$0xff]
    %v712 = vld [vmem:[#allocation9 + $0x300] sm:$0xff]
    %v713 = vld [vmem:[#allocation9 + $0x308] sm:$0xff]
    %v714 = vld [vmem:[#allocation9 + $0x310] sm:$0xff]
    %v715 = vld [vmem:[#allocation9 + $0x318] sm:$0xff]
    %v716 = vld [vmem:[#allocation9 + $0x320] sm:$0xff]
    %v717 = vld [vmem:[#allocation9 + $0x328] sm:$0xff]
    %v718 = vld [vmem:[#allocation9 + $0x330] sm:$0xff]
    %v719 = vld [vmem:[#allocation9 + $0x338] sm:$0xff]
    %v720 = vld [vmem:[#allocation9 + $0x340] sm:$0xff]
    %v721 = vld [vmem:[#allocation9 + $0x348] sm:$0xff]
    %v722 = vld [vmem:[#allocation9 + $0x350] sm:$0xff]
    %v723 = vld [vmem:[#allocation9 + $0x358] sm:$0xff]
    %v724 = vld [vmem:[#allocation9 + $0x360] sm:$0xff]
    %v725 = vld [vmem:[#allocation9 + $0x368] sm:$0xff]
    %v726 = vld [vmem:[#allocation9 + $0x370] sm:$0xff]
    %v727 = vld [vmem:[#allocation9 + $0x378] sm:$0xff]
    %v728 = vld [vmem:[#allocation9 + $0x380] sm:$0xff]
    %v729 = vld [vmem:[#allocation9 + $0x388] sm:$0xff]
    %v730 = vld [vmem:[#allocation9 + $0x390] sm:$0xff]
    %v731 = vld [vmem:[#allocation9 + $0x398] sm:$0xff]
    %v732 = vld [vmem:[#allocation9 + $0x3a0] sm:$0xff]
    %v733 = vld [vmem:[#allocation9 + $0x3a8] sm:$0xff]
    %v734 = vld [vmem:[#allocation9 + $0x3b0] sm:$0xff]
    %v735 = vld [vmem:[#allocation9 + $0x3b8] sm:$0xff]
    %v736 = vld [vmem:[#allocation9 + $0x3c0] sm:$0xff]
    %v737 = vld [vmem:[#allocation9 + $0x3c8] sm:$0xff]
    %v738 = vld [vmem:[#allocation9 + $0x3d0] sm:$0xff]
    %v739 = vld [vmem:[#allocation9 + $0x3d8] sm:$0xff]
    %v740 = vld [vmem:[#allocation9 + $0x3e0] sm:$0xff]
    %v741 = vld [vmem:[#allocation9 + $0x3e8] sm:$0xff]
    %v742 = vld [vmem:[#allocation9 + $0x3f0] sm:$0xff]
    %v743 = vld [vmem:[#allocation9 + $0x3f8] sm:$0xff]
    %v744 = vld [vmem:[#allocation9 + $0x400] sm:$0xff]
    %v745 = vld [vmem:[#allocation9 + $0x408] sm:$0xff]
    %v746 = vld [vmem:[#allocation9 + $0x410] sm:$0xff]
    %v747 = vld [vmem:[#allocation9 + $0x418] sm:$0xff]
    %v748 = vld [vmem:[#allocation9 + $0x420] sm:$0xff]
    %v749 = vld [vmem:[#allocation9 + $0x428] sm:$0xff]
    %v750 = vld [vmem:[#allocation9 + $0x430] sm:$0xff]
    %v751 = vld [vmem:[#allocation9 + $0x438] sm:$0xff]
    %v752 = vld [vmem:[#allocation9 + $0x440] sm:$0xff]
    %v753 = vld [vmem:[#allocation9 + $0x448] sm:$0xff]
    %v754 = vld [vmem:[#allocation9 + $0x450] sm:$0xff]
    %v755 = vld [vmem:[#allocation9 + $0x458] sm:$0xff]
    %v756 = vld [vmem:[#allocation9 + $0x460] sm:$0xff]
    %v757 = vld [vmem:[#allocation9 + $0x468] sm:$0xff]
    %v758 = vld [vmem:[#allocation9 + $0x470] sm:$0xff]
    %v759 = vld [vmem:[#allocation9 + $0x478] sm:$0xff]
    %v760 = vld [vmem:[#allocation9 + $0x480] sm:$0xff]
    %v761 = vld [vmem:[#allocation9 + $0x488] sm:$0xff]
    %v762 = vld [vmem:[#allocation9 + $0x490] sm:$0xff]
    %v763 = vld [vmem:[#allocation9 + $0x498] sm:$0xff]
    %v764 = vld [vmem:[#allocation9 + $0x4a0] sm:$0xff]
    %v765 = vld [vmem:[#allocation9 + $0x4a8] sm:$0xff]
    %v766 = vld [vmem:[#allocation9 + $0x4b0] sm:$0xff]
    %v767 = vld [vmem:[#allocation9 + $0x4b8] sm:$0xff]
    %v768 = vld [vmem:[#allocation9 + $0x4c0] sm:$0xff]
    %v769 = vld [vmem:[#allocation9 + $0x4c8] sm:$0xff]
    %v770 = vld [vmem:[#allocation9 + $0x4d0] sm:$0xff]
    %v771 = vld [vmem:[#allocation9 + $0x4d8] sm:$0xff]
    %v772 = vld [vmem:[#allocation9 + $0x4e0] sm:$0xff]
    %v773 = vld [vmem:[#allocation9 + $0x4e8] sm:$0xff]
    %v774 = vld [vmem:[#allocation9 + $0x4f0] sm:$0xff]
    %v775 = vld [vmem:[#allocation9 + $0x4f8] sm:$0xff]
    %v776 = vld [vmem:[#allocation9 + $0x500] sm:$0xff]
    %v777 = vld [vmem:[#allocation9 + $0x508] sm:$0xff]
    %v778 = vld [vmem:[#allocation9 + $0x510] sm:$0xff]
    %v779 = vld [vmem:[#allocation9 + $0x518] sm:$0xff]
    %v780 = vld [vmem:[#allocation9 + $0x520] sm:$0xff]
    %v781 = vld [vmem:[#allocation9 + $0x528] sm:$0xff]
    %v782 = vld [vmem:[#allocation9 + $0x530] sm:$0xff]
    %v783 = vld [vmem:[#allocation9 + $0x538] sm:$0xff]
    %v784 = vld [vmem:[#allocation9 + $0x540] sm:$0xff]
    %v785 = vld [vmem:[#allocation9 + $0x548] sm:$0xff]
    %v786 = vld [vmem:[#allocation9 + $0x550] sm:$0xff]
    %v787 = vld [vmem:[#allocation9 + $0x558] sm:$0xff]
    %v788 = vld [vmem:[#allocation9 + $0x560] sm:$0xff]
    %v789 = vld [vmem:[#allocation9 + $0x568] sm:$0xff]
    %v790 = vld [vmem:[#allocation9 + $0x570] sm:$0xff]
    %v791 = vld [vmem:[#allocation9 + $0x578] sm:$0xff]
    %v792 = vld [vmem:[#allocation9 + $0x580] sm:$0xff]
    %v793 = vld [vmem:[#allocation9 + $0x588] sm:$0xff]
    %v794 = vld [vmem:[#allocation9 + $0x590] sm:$0xff]
    %v795 = vld [vmem:[#allocation9 + $0x598] sm:$0xff]
    %v796 = vld [vmem:[#allocation9 + $0x5a0] sm:$0xff]
    %v797 = vld [vmem:[#allocation9 + $0x5a8] sm:$0xff]
    %v798 = vld [vmem:[#allocation9 + $0x5b0] sm:$0xff]
    %v799 = vld [vmem:[#allocation9 + $0x5b8] sm:$0xff]
    %v800 = vld [vmem:[#allocation9 + $0x5c0] sm:$0xff]
    %v801 = vld [vmem:[#allocation9 + $0x5c8] sm:$0xff]
    %v802 = vld [vmem:[#allocation9 + $0x5d0] sm:$0xff]
    %v803 = vld [vmem:[#allocation9 + $0x5d8] sm:$0xff]
    %v804 = vld [vmem:[#allocation9 + $0x5e0] sm:$0xff]
    %v805 = vld [vmem:[#allocation9 + $0x5e8] sm:$0xff]
    %v806 = vld [vmem:[#allocation9 + $0x5f0] sm:$0xff]
    %v807 = vld [vmem:[#allocation9 + $0x5f8] sm:$0xff]
    %v808 = vld [vmem:[#allocation9 + $0x600] sm:$0xff]
    %v809 = vld [vmem:[#allocation9 + $0x608] sm:$0xff]
    %v810 = vld [vmem:[#allocation9 + $0x610] sm:$0xff]
    %v811 = vld [vmem:[#allocation9 + $0x618] sm:$0xff]
    %v812 = vld [vmem:[#allocation9 + $0x620] sm:$0xff]
    %v813 = vld [vmem:[#allocation9 + $0x628] sm:$0xff]
    %v814 = vld [vmem:[#allocation9 + $0x630] sm:$0xff]
    %v815 = vld [vmem:[#allocation9 + $0x638] sm:$0xff]
    %v816 = vld [vmem:[#allocation9 + $0x640] sm:$0xff]
    %v817 = vld [vmem:[#allocation9 + $0x648] sm:$0xff]
    %v818 = vld [vmem:[#allocation9 + $0x650] sm:$0xff]
    %v819 = vld [vmem:[#allocation9 + $0x658] sm:$0xff]
    %v820 = vld [vmem:[#allocation9 + $0x660] sm:$0xff]
    %v821 = vld [vmem:[#allocation9 + $0x668] sm:$0xff]
    %v822 = vld [vmem:[#allocation9 + $0x670] sm:$0xff]
    %v823 = vld [vmem:[#allocation9 + $0x678] sm:$0xff]
    %v824 = vld [vmem:[#allocation9 + $0x680] sm:$0xff]
    %v825 = vld [vmem:[#allocation9 + $0x688] sm:$0xff]
    %v826 = vld [vmem:[#allocation9 + $0x690] sm:$0xff]
    %v827 = vld [vmem:[#allocation9 + $0x698] sm:$0xff]
    %v828 = vld [vmem:[#allocation9 + $0x6a0] sm:$0xff]
    %v829 = vld [vmem:[#allocation9 + $0x6a8] sm:$0xff]
    %v830 = vld [vmem:[#allocation9 + $0x6b0] sm:$0xff]
    %v831 = vld [vmem:[#allocation9 + $0x6b8] sm:$0xff]
    %v832 = vld [vmem:[#allocation9 + $0x6c0] sm:$0xff]
    %v833 = vld [vmem:[#allocation9 + $0x6c8] sm:$0xff]
    %v834 = vld [vmem:[#allocation9 + $0x6d0] sm:$0xff]
    %v835 = vld [vmem:[#allocation9 + $0x6d8] sm:$0xff]
    %v836 = vld [vmem:[#allocation9 + $0x6e0] sm:$0xff]
    %v837 = vld [vmem:[#allocation9 + $0x6e8] sm:$0xff]
    %v838 = vld [vmem:[#allocation9 + $0x6f0] sm:$0xff]
    %v839 = vld [vmem:[#allocation9 + $0x6f8] sm:$0xff]
    %v840 = vld [vmem:[#allocation9 + $0x700] sm:$0xff]
    %v841 = vld [vmem:[#allocation9 + $0x708] sm:$0xff]
    %v842 = vld [vmem:[#allocation9 + $0x710] sm:$0xff]
    %v843 = vld [vmem:[#allocation9 + $0x718] sm:$0xff]
    %v844 = vld [vmem:[#allocation9 + $0x720] sm:$0xff]
    %v845 = vld [vmem:[#allocation9 + $0x728] sm:$0xff]
    %v846 = vld [vmem:[#allocation9 + $0x730] sm:$0xff]
    %v847 = vld [vmem:[#allocation9 + $0x738] sm:$0xff]
    %v848 = vld [vmem:[#allocation9 + $0x740] sm:$0xff]
    %v849 = vld [vmem:[#allocation9 + $0x748] sm:$0xff]
    %v850 = vld [vmem:[#allocation9 + $0x750] sm:$0xff]
    %v851 = vld [vmem:[#allocation9 + $0x758] sm:$0xff]
    %v852 = vld [vmem:[#allocation9 + $0x760] sm:$0xff]
    %v853 = vld [vmem:[#allocation9 + $0x768] sm:$0xff]
    %v854 = vld [vmem:[#allocation9 + $0x770] sm:$0xff]
    %v855 = vld [vmem:[#allocation9 + $0x778] sm:$0xff]
    %v856 = vld [vmem:[#allocation9 + $0x780] sm:$0xff]
    %v857 = vld [vmem:[#allocation9 + $0x788] sm:$0xff]
    %v858 = vld [vmem:[#allocation9 + $0x790] sm:$0xff]
    %v859 = vld [vmem:[#allocation9 + $0x798] sm:$0xff]
    %v860 = vld [vmem:[#allocation9 + $0x7a0] sm:$0xff]
    %v861 = vld [vmem:[#allocation9 + $0x7a8] sm:$0xff]
    %v862 = vld [vmem:[#allocation9 + $0x7b0] sm:$0xff]
    %v863 = vld [vmem:[#allocation9 + $0x7b8] sm:$0xff]
    %v864 = vld [vmem:[#allocation9 + $0x7c0] sm:$0xff]
    %v865 = vld [vmem:[#allocation9 + $0x7c8] sm:$0xff]
    %v866 = vld [vmem:[#allocation9 + $0x7d0] sm:$0xff]
    %v867 = vld [vmem:[#allocation9 + $0x7d8] sm:$0xff]
    %v868 = vld [vmem:[#allocation9 + $0x7e0] sm:$0xff]
    %v869 = vld [vmem:[#allocation9 + $0x7e8] sm:$0xff]
    %v870 = vld [vmem:[#allocation9 + $0x7f0] sm:$0xff]
    %v871 = vld [vmem:[#allocation9 + $0x7f8] sm:$0xff]
    %v872 = vld [vmem:[%s3] sm:$0xff]
    %v874 = vlaneseq
    %v875 = vshrl.u32 %v874, 7
    %v876 = vsub.s32 0, %v875
    %v877 = vrot.slane %v872, %v876
    %v878 = vlaneseq
    %v879 = vshrl.u32 %v878, 7
    %v880 = vsub.s32 1, %v879
    %v881 = vrot.slane %v872, %v880
    %v882 = vlaneseq
    %v883 = vshrl.u32 %v882, 7
    %v884 = vsub.s32 2, %v883
    %v885 = vrot.slane %v872, %v884
    %v886 = vlaneseq
    %v887 = vshrl.u32 %v886, 7
    %v888 = vsub.s32 3, %v887
    %v889 = vrot.slane %v872, %v888
    %v890 = vlaneseq
    %v891 = vshrl.u32 %v890, 7
    %v892 = vsub.s32 4, %v891
    %v893 = vrot.slane %v872, %v892
    %v894 = vlaneseq
    %v895 = vshrl.u32 %v894, 7
    %v896 = vsub.s32 5, %v895
    %v897 = vrot.slane %v872, %v896
    %v898 = vlaneseq
    %v899 = vshrl.u32 %v898, 7
    %v900 = vsub.s32 6, %v899
    %v901 = vrot.slane %v872, %v900
    %v902 = vlaneseq
    %v903 = vshrl.u32 %v902, 7
    %v904 = vsub.s32 7, %v903
    %v905 = vrot.slane %v872, %v904
    %v1170 = vunpack.c.l.b16 %v616
    %v1171 = vunpack.c.h.b16 %v616
    %v1172 = vunpack.c.l.b16 %v617
    %v1173 = vunpack.c.h.b16 %v617
    %v1174 = vunpack.c.l.b16 %v618
    %v1175 = vunpack.c.h.b16 %v618
    %v1176 = vunpack.c.l.b16 %v619
    %v1177 = vunpack.c.h.b16 %v619
    %v1178 = vunpack.c.l.b16 %v620
    %v1179 = vunpack.c.h.b16 %v620
    %v1180 = vunpack.c.l.b16 %v621
    %v1181 = vunpack.c.h.b16 %v621
    %v1182 = vunpack.c.l.b16 %v622
    %v1183 = vunpack.c.h.b16 %v622
    %v1184 = vunpack.c.l.b16 %v623
    %v1185 = vunpack.c.h.b16 %v623
    %v1186 = vunpack.c.l.b16 %v624
    %v1187 = vunpack.c.h.b16 %v624
    %v1188 = vunpack.c.l.b16 %v625
    %v1189 = vunpack.c.h.b16 %v625
    %v1190 = vunpack.c.l.b16 %v626
    %v1191 = vunpack.c.h.b16 %v626
    %v1192 = vunpack.c.l.b16 %v627
    %v1193 = vunpack.c.h.b16 %v627
    %v1194 = vunpack.c.l.b16 %v628
    %v1195 = vunpack.c.h.b16 %v628
    %v1196 = vunpack.c.l.b16 %v629
    %v1197 = vunpack.c.h.b16 %v629
    %v1198 = vunpack.c.l.b16 %v630
    %v1199 = vunpack.c.h.b16 %v630
    %v1200 = vunpack.c.l.b16 %v631
    %v1201 = vunpack.c.h.b16 %v631
    %v1202 = vunpack.c.l.b16 %v632
    %v1203 = vunpack.c.h.b16 %v632
    %v1204 = vunpack.c.l.b16 %v633
    %v1205 = vunpack.c.h.b16 %v633
    %v1206 = vunpack.c.l.b16 %v634
    %v1207 = vunpack.c.h.b16 %v634
    %v1208 = vunpack.c.l.b16 %v635
    %v1209 = vunpack.c.h.b16 %v635
    %v1210 = vunpack.c.l.b16 %v636
    %v1211 = vunpack.c.h.b16 %v636
    %v1212 = vunpack.c.l.b16 %v637
    %v1213 = vunpack.c.h.b16 %v637
    %v1214 = vunpack.c.l.b16 %v638
    %v1215 = vunpack.c.h.b16 %v638
    %v1216 = vunpack.c.l.b16 %v639
    %v1217 = vunpack.c.h.b16 %v639
    %v1218 = vunpack.c.l.b16 %v640
    %v1219 = vunpack.c.h.b16 %v640
    %v1220 = vunpack.c.l.b16 %v641
    %v1221 = vunpack.c.h.b16 %v641
    %v1222 = vunpack.c.l.b16 %v642
    %v1223 = vunpack.c.h.b16 %v642
    %v1224 = vunpack.c.l.b16 %v643
    %v1225 = vunpack.c.h.b16 %v643
    %v1226 = vunpack.c.l.b16 %v644
    %v1227 = vunpack.c.h.b16 %v644
    %v1228 = vunpack.c.l.b16 %v645
    %v1229 = vunpack.c.h.b16 %v645
    %v1230 = vunpack.c.l.b16 %v646
    %v1231 = vunpack.c.h.b16 %v646
    %v1232 = vunpack.c.l.b16 %v647
    %v1233 = vunpack.c.h.b16 %v647
    %v1234 = vunpack.c.l.b16 %v648
    %v1235 = vunpack.c.h.b16 %v648
    %v1236 = vunpack.c.l.b16 %v649
    %v1237 = vunpack.c.h.b16 %v649
    %v1238 = vunpack.c.l.b16 %v650
    %v1239 = vunpack.c.h.b16 %v650
    %v1240 = vunpack.c.l.b16 %v651
    %v1241 = vunpack.c.h.b16 %v651
    %v1242 = vunpack.c.l.b16 %v652
    %v1243 = vunpack.c.h.b16 %v652
    %v1244 = vunpack.c.l.b16 %v653
    %v1245 = vunpack.c.h.b16 %v653
    %v1246 = vunpack.c.l.b16 %v654
    %v1247 = vunpack.c.h.b16 %v654
    %v1248 = vunpack.c.l.b16 %v655
    %v1249 = vunpack.c.h.b16 %v655
    %v1250 = vunpack.c.l.b16 %v656
    %v1251 = vunpack.c.h.b16 %v656
    %v1252 = vunpack.c.l.b16 %v657
    %v1253 = vunpack.c.h.b16 %v657
    %v1254 = vunpack.c.l.b16 %v658
    %v1255 = vunpack.c.h.b16 %v658
    %v1256 = vunpack.c.l.b16 %v659
    %v1257 = vunpack.c.h.b16 %v659
    %v1258 = vunpack.c.l.b16 %v660
    %v1259 = vunpack.c.h.b16 %v660
    %v1260 = vunpack.c.l.b16 %v661
    %v1261 = vunpack.c.h.b16 %v661
    %v1262 = vunpack.c.l.b16 %v662
    %v1263 = vunpack.c.h.b16 %v662
    %v1264 = vunpack.c.l.b16 %v663
    %v1265 = vunpack.c.h.b16 %v663
    %v1266 = vunpack.c.l.b16 %v664
    %v1267 = vunpack.c.h.b16 %v664
    %v1268 = vunpack.c.l.b16 %v665
    %v1269 = vunpack.c.h.b16 %v665
    %v1270 = vunpack.c.l.b16 %v666
    %v1271 = vunpack.c.h.b16 %v666
    %v1272 = vunpack.c.l.b16 %v667
    %v1273 = vunpack.c.h.b16 %v667
    %v1274 = vunpack.c.l.b16 %v668
    %v1275 = vunpack.c.h.b16 %v668
    %v1276 = vunpack.c.l.b16 %v669
    %v1277 = vunpack.c.h.b16 %v669
    %v1278 = vunpack.c.l.b16 %v670
    %v1279 = vunpack.c.h.b16 %v670
    %v1280 = vunpack.c.l.b16 %v671
    %v1281 = vunpack.c.h.b16 %v671
    %v1282 = vunpack.c.l.b16 %v672
    %v1283 = vunpack.c.h.b16 %v672
    %v1284 = vunpack.c.l.b16 %v673
    %v1285 = vunpack.c.h.b16 %v673
    %v1286 = vunpack.c.l.b16 %v674
    %v1287 = vunpack.c.h.b16 %v674
    %v1288 = vunpack.c.l.b16 %v675
    %v1289 = vunpack.c.h.b16 %v675
    %v1290 = vunpack.c.l.b16 %v676
    %v1291 = vunpack.c.h.b16 %v676
    %v1292 = vunpack.c.l.b16 %v677
    %v1293 = vunpack.c.h.b16 %v677
    %v1294 = vunpack.c.l.b16 %v678
    %v1295 = vunpack.c.h.b16 %v678
    %v1296 = vunpack.c.l.b16 %v679
    %v1297 = vunpack.c.h.b16 %v679
    %v1298 = vunpack.c.l.b16 %v680
    %v1299 = vunpack.c.h.b16 %v680
    %v1300 = vunpack.c.l.b16 %v681
    %v1301 = vunpack.c.h.b16 %v681
    %v1302 = vunpack.c.l.b16 %v682
    %v1303 = vunpack.c.h.b16 %v682
    %v1304 = vunpack.c.l.b16 %v683
    %v1305 = vunpack.c.h.b16 %v683
    %v1306 = vunpack.c.l.b16 %v684
    %v1307 = vunpack.c.h.b16 %v684
    %v1308 = vunpack.c.l.b16 %v685
    %v1309 = vunpack.c.h.b16 %v685
    %v1310 = vunpack.c.l.b16 %v686
    %v1311 = vunpack.c.h.b16 %v686
    %v1312 = vunpack.c.l.b16 %v687
    %v1313 = vunpack.c.h.b16 %v687
    %v1314 = vunpack.c.l.b16 %v688
    %v1315 = vunpack.c.h.b16 %v688
    %v1316 = vunpack.c.l.b16 %v689
    %v1317 = vunpack.c.h.b16 %v689
    %v1318 = vunpack.c.l.b16 %v690
    %v1319 = vunpack.c.h.b16 %v690
    %v1320 = vunpack.c.l.b16 %v691
    %v1321 = vunpack.c.h.b16 %v691
    %v1322 = vunpack.c.l.b16 %v692
    %v1323 = vunpack.c.h.b16 %v692
    %v1324 = vunpack.c.l.b16 %v693
    %v1325 = vunpack.c.h.b16 %v693
    %v1326 = vunpack.c.l.b16 %v694
    %v1327 = vunpack.c.h.b16 %v694
    %v1328 = vunpack.c.l.b16 %v695
    %v1329 = vunpack.c.h.b16 %v695
    %v1330 = vunpack.c.l.b16 %v696
    %v1331 = vunpack.c.h.b16 %v696
    %v1332 = vunpack.c.l.b16 %v697
    %v1333 = vunpack.c.h.b16 %v697
    %v1334 = vunpack.c.l.b16 %v698
    %v1335 = vunpack.c.h.b16 %v698
    %v1336 = vunpack.c.l.b16 %v699
    %v1337 = vunpack.c.h.b16 %v699
    %v1338 = vunpack.c.l.b16 %v700
    %v1339 = vunpack.c.h.b16 %v700
    %v1340 = vunpack.c.l.b16 %v701
    %v1341 = vunpack.c.h.b16 %v701
    %v1342 = vunpack.c.l.b16 %v702
    %v1343 = vunpack.c.h.b16 %v702
    %v1344 = vunpack.c.l.b16 %v703
    %v1345 = vunpack.c.h.b16 %v703
    %v1346 = vunpack.c.l.b16 %v704
    %v1347 = vunpack.c.h.b16 %v704
    %v1348 = vunpack.c.l.b16 %v705
    %v1349 = vunpack.c.h.b16 %v705
    %v1350 = vunpack.c.l.b16 %v706
    %v1351 = vunpack.c.h.b16 %v706
    %v1352 = vunpack.c.l.b16 %v707
    %v1353 = vunpack.c.h.b16 %v707
    %v1354 = vunpack.c.l.b16 %v708
    %v1355 = vunpack.c.h.b16 %v708
    %v1356 = vunpack.c.l.b16 %v709
    %v1357 = vunpack.c.h.b16 %v709
    %v1358 = vunpack.c.l.b16 %v710
    %v1359 = vunpack.c.h.b16 %v710
    %v1360 = vunpack.c.l.b16 %v711
    %v1361 = vunpack.c.h.b16 %v711
    %v1362 = vunpack.c.l.b16 %v712
    %v1363 = vunpack.c.h.b16 %v712
    %v1364 = vunpack.c.l.b16 %v713
    %v1365 = vunpack.c.h.b16 %v713
    %v1366 = vunpack.c.l.b16 %v714
    %v1367 = vunpack.c.h.b16 %v714
    %v1368 = vunpack.c.l.b16 %v715
    %v1369 = vunpack.c.h.b16 %v715
    %v1370 = vunpack.c.l.b16 %v716
    %v1371 = vunpack.c.h.b16 %v716
    %v1372 = vunpack.c.l.b16 %v717
    %v1373 = vunpack.c.h.b16 %v717
    %v1374 = vunpack.c.l.b16 %v718
    %v1375 = vunpack.c.h.b16 %v718
    %v1376 = vunpack.c.l.b16 %v719
    %v1377 = vunpack.c.h.b16 %v719
    %v1378 = vunpack.c.l.b16 %v720
    %v1379 = vunpack.c.h.b16 %v720
    %v1380 = vunpack.c.l.b16 %v721
    %v1381 = vunpack.c.h.b16 %v721
    %v1382 = vunpack.c.l.b16 %v722
    %v1383 = vunpack.c.h.b16 %v722
    %v1384 = vunpack.c.l.b16 %v723
    %v1385 = vunpack.c.h.b16 %v723
    %v1386 = vunpack.c.l.b16 %v724
    %v1387 = vunpack.c.h.b16 %v724
    %v1388 = vunpack.c.l.b16 %v725
    %v1389 = vunpack.c.h.b16 %v725
    %v1390 = vunpack.c.l.b16 %v726
    %v1391 = vunpack.c.h.b16 %v726
    %v1392 = vunpack.c.l.b16 %v727
    %v1393 = vunpack.c.h.b16 %v727
    %v1394 = vunpack.c.l.b16 %v728
    %v1395 = vunpack.c.h.b16 %v728
    %v1396 = vunpack.c.l.b16 %v729
    %v1397 = vunpack.c.h.b16 %v729
    %v1398 = vunpack.c.l.b16 %v730
    %v1399 = vunpack.c.h.b16 %v730
    %v1400 = vunpack.c.l.b16 %v731
    %v1401 = vunpack.c.h.b16 %v731
    %v1402 = vunpack.c.l.b16 %v732
    %v1403 = vunpack.c.h.b16 %v732
    %v1404 = vunpack.c.l.b16 %v733
    %v1405 = vunpack.c.h.b16 %v733
    %v1406 = vunpack.c.l.b16 %v734
    %v1407 = vunpack.c.h.b16 %v734
    %v1408 = vunpack.c.l.b16 %v735
    %v1409 = vunpack.c.h.b16 %v735
    %v1410 = vunpack.c.l.b16 %v736
    %v1411 = vunpack.c.h.b16 %v736
    %v1412 = vunpack.c.l.b16 %v737
    %v1413 = vunpack.c.h.b16 %v737
    %v1414 = vunpack.c.l.b16 %v738
    %v1415 = vunpack.c.h.b16 %v738
    %v1416 = vunpack.c.l.b16 %v739
    %v1417 = vunpack.c.h.b16 %v739
    %v1418 = vunpack.c.l.b16 %v740
    %v1419 = vunpack.c.h.b16 %v740
    %v1420 = vunpack.c.l.b16 %v741
    %v1421 = vunpack.c.h.b16 %v741
    %v1422 = vunpack.c.l.b16 %v742
    %v1423 = vunpack.c.h.b16 %v742
    %v1424 = vunpack.c.l.b16 %v743
    %v1425 = vunpack.c.h.b16 %v743
    %v1426 = vunpack.c.l.b16 %v744
    %v1427 = vunpack.c.h.b16 %v744
    %v1428 = vunpack.c.l.b16 %v745
    %v1429 = vunpack.c.h.b16 %v745
    %v1430 = vunpack.c.l.b16 %v746
    %v1431 = vunpack.c.h.b16 %v746
    %v1432 = vunpack.c.l.b16 %v747
    %v1433 = vunpack.c.h.b16 %v747
    %v1434 = vunpack.c.l.b16 %v748
    %v1435 = vunpack.c.h.b16 %v748
    %v1436 = vunpack.c.l.b16 %v749
    %v1437 = vunpack.c.h.b16 %v749
    %v1438 = vunpack.c.l.b16 %v750
    %v1439 = vunpack.c.h.b16 %v750
    %v1440 = vunpack.c.l.b16 %v751
    %v1441 = vunpack.c.h.b16 %v751
    %v1442 = vunpack.c.l.b16 %v752
    %v1443 = vunpack.c.h.b16 %v752
    %v1444 = vunpack.c.l.b16 %v753
    %v1445 = vunpack.c.h.b16 %v753
    %v1446 = vunpack.c.l.b16 %v754
    %v1447 = vunpack.c.h.b16 %v754
    %v1448 = vunpack.c.l.b16 %v755
    %v1449 = vunpack.c.h.b16 %v755
    %v1450 = vunpack.c.l.b16 %v756
    %v1451 = vunpack.c.h.b16 %v756
    %v1452 = vunpack.c.l.b16 %v757
    %v1453 = vunpack.c.h.b16 %v757
    %v1454 = vunpack.c.l.b16 %v758
    %v1455 = vunpack.c.h.b16 %v758
    %v1456 = vunpack.c.l.b16 %v759
    %v1457 = vunpack.c.h.b16 %v759
    %v1458 = vunpack.c.l.b16 %v760
    %v1459 = vunpack.c.h.b16 %v760
    %v1460 = vunpack.c.l.b16 %v761
    %v1461 = vunpack.c.h.b16 %v761
    %v1462 = vunpack.c.l.b16 %v762
    %v1463 = vunpack.c.h.b16 %v762
    %v1464 = vunpack.c.l.b16 %v763
    %v1465 = vunpack.c.h.b16 %v763
    %v1466 = vunpack.c.l.b16 %v764
    %v1467 = vunpack.c.h.b16 %v764
    %v1468 = vunpack.c.l.b16 %v765
    %v1469 = vunpack.c.h.b16 %v765
    %v1470 = vunpack.c.l.b16 %v766
    %v1471 = vunpack.c.h.b16 %v766
    %v1472 = vunpack.c.l.b16 %v767
    %v1473 = vunpack.c.h.b16 %v767
    %v1474 = vunpack.c.l.b16 %v768
    %v1475 = vunpack.c.h.b16 %v768
    %v1476 = vunpack.c.l.b16 %v769
    %v1477 = vunpack.c.h.b16 %v769
    %v1478 = vunpack.c.l.b16 %v770
    %v1479 = vunpack.c.h.b16 %v770
    %v1480 = vunpack.c.l.b16 %v771
    %v1481 = vunpack.c.h.b16 %v771
    %v1482 = vunpack.c.l.b16 %v772
    %v1483 = vunpack.c.h.b16 %v772
    %v1484 = vunpack.c.l.b16 %v773
    %v1485 = vunpack.c.h.b16 %v773
    %v1486 = vunpack.c.l.b16 %v774
    %v1487 = vunpack.c.h.b16 %v774
    %v1488 = vunpack.c.l.b16 %v775
    %v1489 = vunpack.c.h.b16 %v775
    %v1490 = vunpack.c.l.b16 %v776
    %v1491 = vunpack.c.h.b16 %v776
    %v1492 = vunpack.c.l.b16 %v777
    %v1493 = vunpack.c.h.b16 %v777
    %v1494 = vunpack.c.l.b16 %v778
    %v1495 = vunpack.c.h.b16 %v778
    %v1496 = vunpack.c.l.b16 %v779
    %v1497 = vunpack.c.h.b16 %v779
    %v1498 = vunpack.c.l.b16 %v780
    %v1499 = vunpack.c.h.b16 %v780
    %v1500 = vunpack.c.l.b16 %v781
    %v1501 = vunpack.c.h.b16 %v781
    %v1502 = vunpack.c.l.b16 %v782
    %v1503 = vunpack.c.h.b16 %v782
    %v1504 = vunpack.c.l.b16 %v783
    %v1505 = vunpack.c.h.b16 %v783
    %v1506 = vunpack.c.l.b16 %v784
    %v1507 = vunpack.c.h.b16 %v784
    %v1508 = vunpack.c.l.b16 %v785
    %v1509 = vunpack.c.h.b16 %v785
    %v1510 = vunpack.c.l.b16 %v786
    %v1511 = vunpack.c.h.b16 %v786
    %v1512 = vunpack.c.l.b16 %v787
    %v1513 = vunpack.c.h.b16 %v787
    %v1514 = vunpack.c.l.b16 %v788
    %v1515 = vunpack.c.h.b16 %v788
    %v1516 = vunpack.c.l.b16 %v789
    %v1517 = vunpack.c.h.b16 %v789
    %v1518 = vunpack.c.l.b16 %v790
    %v1519 = vunpack.c.h.b16 %v790
    %v1520 = vunpack.c.l.b16 %v791
    %v1521 = vunpack.c.h.b16 %v791
    %v1522 = vunpack.c.l.b16 %v792
    %v1523 = vunpack.c.h.b16 %v792
    %v1524 = vunpack.c.l.b16 %v793
    %v1525 = vunpack.c.h.b16 %v793
    %v1526 = vunpack.c.l.b16 %v794
    %v1527 = vunpack.c.h.b16 %v794
    %v1528 = vunpack.c.l.b16 %v795
    %v1529 = vunpack.c.h.b16 %v795
    %v1530 = vunpack.c.l.b16 %v796
    %v1531 = vunpack.c.h.b16 %v796
    %v1532 = vunpack.c.l.b16 %v797
    %v1533 = vunpack.c.h.b16 %v797
    %v1534 = vunpack.c.l.b16 %v798
    %v1535 = vunpack.c.h.b16 %v798
    %v1536 = vunpack.c.l.b16 %v799
    %v1537 = vunpack.c.h.b16 %v799
    %v1538 = vunpack.c.l.b16 %v800
    %v1539 = vunpack.c.h.b16 %v800
    %v1540 = vunpack.c.l.b16 %v801
    %v1541 = vunpack.c.h.b16 %v801
    %v1542 = vunpack.c.l.b16 %v802
    %v1543 = vunpack.c.h.b16 %v802
    %v1544 = vunpack.c.l.b16 %v803
    %v1545 = vunpack.c.h.b16 %v803
    %v1546 = vunpack.c.l.b16 %v804
    %v1547 = vunpack.c.h.b16 %v804
    %v1548 = vunpack.c.l.b16 %v805
    %v1549 = vunpack.c.h.b16 %v805
    %v1550 = vunpack.c.l.b16 %v806
    %v1551 = vunpack.c.h.b16 %v806
    %v1552 = vunpack.c.l.b16 %v807
    %v1553 = vunpack.c.h.b16 %v807
    %v1554 = vunpack.c.l.b16 %v808
    %v1555 = vunpack.c.h.b16 %v808
    %v1556 = vunpack.c.l.b16 %v809
    %v1557 = vunpack.c.h.b16 %v809
    %v1558 = vunpack.c.l.b16 %v810
    %v1559 = vunpack.c.h.b16 %v810
    %v1560 = vunpack.c.l.b16 %v811
    %v1561 = vunpack.c.h.b16 %v811
    %v1562 = vunpack.c.l.b16 %v812
    %v1563 = vunpack.c.h.b16 %v812
    %v1564 = vunpack.c.l.b16 %v813
    %v1565 = vunpack.c.h.b16 %v813
    %v1566 = vunpack.c.l.b16 %v814
    %v1567 = vunpack.c.h.b16 %v814
    %v1568 = vunpack.c.l.b16 %v815
    %v1569 = vunpack.c.h.b16 %v815
    %v1570 = vunpack.c.l.b16 %v816
    %v1571 = vunpack.c.h.b16 %v816
    %v1572 = vunpack.c.l.b16 %v817
    %v1573 = vunpack.c.h.b16 %v817
    %v1574 = vunpack.c.l.b16 %v818
    %v1575 = vunpack.c.h.b16 %v818
    %v1576 = vunpack.c.l.b16 %v819
    %v1577 = vunpack.c.h.b16 %v819
    %v1578 = vunpack.c.l.b16 %v820
    %v1579 = vunpack.c.h.b16 %v820
    %v1580 = vunpack.c.l.b16 %v821
    %v1581 = vunpack.c.h.b16 %v821
    %v1582 = vunpack.c.l.b16 %v822
    %v1583 = vunpack.c.h.b16 %v822
    %v1584 = vunpack.c.l.b16 %v823
    %v1585 = vunpack.c.h.b16 %v823
    %v1586 = vunpack.c.l.b16 %v824
    %v1587 = vunpack.c.h.b16 %v824
    %v1588 = vunpack.c.l.b16 %v825
    %v1589 = vunpack.c.h.b16 %v825
    %v1590 = vunpack.c.l.b16 %v826
    %v1591 = vunpack.c.h.b16 %v826
    %v1592 = vunpack.c.l.b16 %v827
    %v1593 = vunpack.c.h.b16 %v827
    %v1594 = vunpack.c.l.b16 %v828
    %v1595 = vunpack.c.h.b16 %v828
    %v1596 = vunpack.c.l.b16 %v829
    %v1597 = vunpack.c.h.b16 %v829
    %v1598 = vunpack.c.l.b16 %v830
    %v1599 = vunpack.c.h.b16 %v830
    %v1600 = vunpack.c.l.b16 %v831
    %v1601 = vunpack.c.h.b16 %v831
    %v1602 = vunpack.c.l.b16 %v832
    %v1603 = vunpack.c.h.b16 %v832
    %v1604 = vunpack.c.l.b16 %v833
    %v1605 = vunpack.c.h.b16 %v833
    %v1606 = vunpack.c.l.b16 %v834
    %v1607 = vunpack.c.h.b16 %v834
    %v1608 = vunpack.c.l.b16 %v835
    %v1609 = vunpack.c.h.b16 %v835
    %v1610 = vunpack.c.l.b16 %v836
    %v1611 = vunpack.c.h.b16 %v836
    %v1612 = vunpack.c.l.b16 %v837
    %v1613 = vunpack.c.h.b16 %v837
    %v1614 = vunpack.c.l.b16 %v838
    %v1615 = vunpack.c.h.b16 %v838
    %v1616 = vunpack.c.l.b16 %v839
    %v1617 = vunpack.c.h.b16 %v839
    %v1618 = vunpack.c.l.b16 %v840
    %v1619 = vunpack.c.h.b16 %v840
    %v1620 = vunpack.c.l.b16 %v841
    %v1621 = vunpack.c.h.b16 %v841
    %v1622 = vunpack.c.l.b16 %v842
    %v1623 = vunpack.c.h.b16 %v842
    %v1624 = vunpack.c.l.b16 %v843
    %v1625 = vunpack.c.h.b16 %v843
    %v1626 = vunpack.c.l.b16 %v844
    %v1627 = vunpack.c.h.b16 %v844
    %v1628 = vunpack.c.l.b16 %v845
    %v1629 = vunpack.c.h.b16 %v845
    %v1630 = vunpack.c.l.b16 %v846
    %v1631 = vunpack.c.h.b16 %v846
    %v1632 = vunpack.c.l.b16 %v847
    %v1633 = vunpack.c.h.b16 %v847
    %v1634 = vunpack.c.l.b16 %v848
    %v1635 = vunpack.c.h.b16 %v848
    %v1636 = vunpack.c.l.b16 %v849
    %v1637 = vunpack.c.h.b16 %v849
    %v1638 = vunpack.c.l.b16 %v850
    %v1639 = vunpack.c.h.b16 %v850
    %v1640 = vunpack.c.l.b16 %v851
    %v1641 = vunpack.c.h.b16 %v851
    %v1642 = vunpack.c.l.b16 %v852
    %v1643 = vunpack.c.h.b16 %v852
    %v1644 = vunpack.c.l.b16 %v853
    %v1645 = vunpack.c.h.b16 %v853
    %v1646 = vunpack.c.l.b16 %v854
    %v1647 = vunpack.c.h.b16 %v854
    %v1648 = vunpack.c.l.b16 %v855
    %v1649 = vunpack.c.h.b16 %v855
    %v1650 = vunpack.c.l.b16 %v856
    %v1651 = vunpack.c.h.b16 %v856
    %v1652 = vunpack.c.l.b16 %v857
    %v1653 = vunpack.c.h.b16 %v857
    %v1654 = vunpack.c.l.b16 %v858
    %v1655 = vunpack.c.h.b16 %v858
    %v1656 = vunpack.c.l.b16 %v859
    %v1657 = vunpack.c.h.b16 %v859
    %v1658 = vunpack.c.l.b16 %v860
    %v1659 = vunpack.c.h.b16 %v860
    %v1660 = vunpack.c.l.b16 %v861
    %v1661 = vunpack.c.h.b16 %v861
    %v1662 = vunpack.c.l.b16 %v862
    %v1663 = vunpack.c.h.b16 %v862
    %v1664 = vunpack.c.l.b16 %v863
    %v1665 = vunpack.c.h.b16 %v863
    %v1666 = vunpack.c.l.b16 %v864
    %v1667 = vunpack.c.h.b16 %v864
    %v1668 = vunpack.c.l.b16 %v865
    %v1669 = vunpack.c.h.b16 %v865
    %v1670 = vunpack.c.l.b16 %v866
    %v1671 = vunpack.c.h.b16 %v866
    %v1672 = vunpack.c.l.b16 %v867
    %v1673 = vunpack.c.h.b16 %v867
    %v1674 = vunpack.c.l.b16 %v868
    %v1675 = vunpack.c.h.b16 %v868
    %v1676 = vunpack.c.l.b16 %v869
    %v1677 = vunpack.c.h.b16 %v869
    %v1678 = vunpack.c.l.b16 %v870
    %v1679 = vunpack.c.h.b16 %v870
    %v1680 = vunpack.c.l.b16 %v871
    %v1681 = vunpack.c.h.b16 %v871
    %v1682 = vpack.c.b16 %v1178, %v1170
    %v1683 = vpack.c.b16 %v1179, %v1171
    %v1684 = vpack.c.b16 %v1180, %v1172
    %v1685 = vpack.c.b16 %v1181, %v1173
    %v1686 = vpack.c.b16 %v1182, %v1174
    %v1687 = vpack.c.b16 %v1183, %v1175
    %v1688 = vpack.c.b16 %v1184, %v1176
    %v1689 = vpack.c.b16 %v1185, %v1177
    %v1690 = vpack.c.b16 %v1194, %v1186
    %v1691 = vpack.c.b16 %v1195, %v1187
    %v1692 = vpack.c.b16 %v1196, %v1188
    %v1693 = vpack.c.b16 %v1197, %v1189
    %v1694 = vpack.c.b16 %v1198, %v1190
    %v1695 = vpack.c.b16 %v1199, %v1191
    %v1696 = vpack.c.b16 %v1200, %v1192
    %v1697 = vpack.c.b16 %v1201, %v1193
    %v1698 = vpack.c.b16 %v1210, %v1202
    %v1699 = vpack.c.b16 %v1211, %v1203
    %v1700 = vpack.c.b16 %v1212, %v1204
    %v1701 = vpack.c.b16 %v1213, %v1205
    %v1702 = vpack.c.b16 %v1214, %v1206
    %v1703 = vpack.c.b16 %v1215, %v1207
    %v1704 = vpack.c.b16 %v1216, %v1208
    %v1705 = vpack.c.b16 %v1217, %v1209
    %v1706 = vpack.c.b16 %v1226, %v1218
    %v1707 = vpack.c.b16 %v1227, %v1219
    %v1708 = vpack.c.b16 %v1228, %v1220
    %v1709 = vpack.c.b16 %v1229, %v1221
    %v1710 = vpack.c.b16 %v1230, %v1222
    %v1711 = vpack.c.b16 %v1231, %v1223
    %v1712 = vpack.c.b16 %v1232, %v1224
    %v1713 = vpack.c.b16 %v1233, %v1225
    %v1714 = vpack.c.b16 %v1242, %v1234
    %v1715 = vpack.c.b16 %v1243, %v1235
    %v1716 = vpack.c.b16 %v1244, %v1236
    %v1717 = vpack.c.b16 %v1245, %v1237
    %v1718 = vpack.c.b16 %v1246, %v1238
    %v1719 = vpack.c.b16 %v1247, %v1239
    %v1720 = vpack.c.b16 %v1248, %v1240
    %v1721 = vpack.c.b16 %v1249, %v1241
    %v1722 = vpack.c.b16 %v1258, %v1250
    %v1723 = vpack.c.b16 %v1259, %v1251
    %v1724 = vpack.c.b16 %v1260, %v1252
    %v1725 = vpack.c.b16 %v1261, %v1253
    %v1726 = vpack.c.b16 %v1262, %v1254
    %v1727 = vpack.c.b16 %v1263, %v1255
    %v1728 = vpack.c.b16 %v1264, %v1256
    %v1729 = vpack.c.b16 %v1265, %v1257
    %v1730 = vpack.c.b16 %v1274, %v1266
    %v1731 = vpack.c.b16 %v1275, %v1267
    %v1732 = vpack.c.b16 %v1276, %v1268
    %v1733 = vpack.c.b16 %v1277, %v1269
    %v1734 = vpack.c.b16 %v1278, %v1270
    %v1735 = vpack.c.b16 %v1279, %v1271
    %v1736 = vpack.c.b16 %v1280, %v1272
    %v1737 = vpack.c.b16 %v1281, %v1273
    %v1738 = vpack.c.b16 %v1290, %v1282
    %v1739 = vpack.c.b16 %v1291, %v1283
    %v1740 = vpack.c.b16 %v1292, %v1284
    %v1741 = vpack.c.b16 %v1293, %v1285
    %v1742 = vpack.c.b16 %v1294, %v1286
    %v1743 = vpack.c.b16 %v1295, %v1287
    %v1744 = vpack.c.b16 %v1296, %v1288
    %v1745 = vpack.c.b16 %v1297, %v1289
    %v1746 = vpack.c.b16 %v1306, %v1298
    %v1747 = vpack.c.b16 %v1307, %v1299
    %v1748 = vpack.c.b16 %v1308, %v1300
    %v1749 = vpack.c.b16 %v1309, %v1301
    %v1750 = vpack.c.b16 %v1310, %v1302
    %v1751 = vpack.c.b16 %v1311, %v1303
    %v1752 = vpack.c.b16 %v1312, %v1304
    %v1753 = vpack.c.b16 %v1313, %v1305
    %v1754 = vpack.c.b16 %v1322, %v1314
    %v1755 = vpack.c.b16 %v1323, %v1315
    %v1756 = vpack.c.b16 %v1324, %v1316
    %v1757 = vpack.c.b16 %v1325, %v1317
    %v1758 = vpack.c.b16 %v1326, %v1318
    %v1759 = vpack.c.b16 %v1327, %v1319
    %v1760 = vpack.c.b16 %v1328, %v1320
    %v1761 = vpack.c.b16 %v1329, %v1321
    %v1762 = vpack.c.b16 %v1338, %v1330
    %v1763 = vpack.c.b16 %v1339, %v1331
    %v1764 = vpack.c.b16 %v1340, %v1332
    %v1765 = vpack.c.b16 %v1341, %v1333
    %v1766 = vpack.c.b16 %v1342, %v1334
    %v1767 = vpack.c.b16 %v1343, %v1335
    %v1768 = vpack.c.b16 %v1344, %v1336
    %v1769 = vpack.c.b16 %v1345, %v1337
    %v1770 = vpack.c.b16 %v1354, %v1346
    %v1771 = vpack.c.b16 %v1355, %v1347
    %v1772 = vpack.c.b16 %v1356, %v1348
    %v1773 = vpack.c.b16 %v1357, %v1349
    %v1774 = vpack.c.b16 %v1358, %v1350
    %v1775 = vpack.c.b16 %v1359, %v1351
    %v1776 = vpack.c.b16 %v1360, %v1352
    %v1777 = vpack.c.b16 %v1361, %v1353
    %v1778 = vpack.c.b16 %v1370, %v1362
    %v1779 = vpack.c.b16 %v1371, %v1363
    %v1780 = vpack.c.b16 %v1372, %v1364
    %v1781 = vpack.c.b16 %v1373, %v1365
    %v1782 = vpack.c.b16 %v1374, %v1366
    %v1783 = vpack.c.b16 %v1375, %v1367
    %v1784 = vpack.c.b16 %v1376, %v1368
    %v1785 = vpack.c.b16 %v1377, %v1369
    %v1786 = vpack.c.b16 %v1386, %v1378
    %v1787 = vpack.c.b16 %v1387, %v1379
    %v1788 = vpack.c.b16 %v1388, %v1380
    %v1789 = vpack.c.b16 %v1389, %v1381
    %v1790 = vpack.c.b16 %v1390, %v1382
    %v1791 = vpack.c.b16 %v1391, %v1383
    %v1792 = vpack.c.b16 %v1392, %v1384
    %v1793 = vpack.c.b16 %v1393, %v1385
    %v1794 = vpack.c.b16 %v1402, %v1394
    %v1795 = vpack.c.b16 %v1403, %v1395
    %v1796 = vpack.c.b16 %v1404, %v1396
    %v1797 = vpack.c.b16 %v1405, %v1397
    %v1798 = vpack.c.b16 %v1406, %v1398
    %v1799 = vpack.c.b16 %v1407, %v1399
    %v1800 = vpack.c.b16 %v1408, %v1400
    %v1801 = vpack.c.b16 %v1409, %v1401
    %v1802 = vpack.c.b16 %v1418, %v1410
    %v1803 = vpack.c.b16 %v1419, %v1411
    %v1804 = vpack.c.b16 %v1420, %v1412
    %v1805 = vpack.c.b16 %v1421, %v1413
    %v1806 = vpack.c.b16 %v1422, %v1414
    %v1807 = vpack.c.b16 %v1423, %v1415
    %v1808 = vpack.c.b16 %v1424, %v1416
    %v1809 = vpack.c.b16 %v1425, %v1417
    %v1810 = vpack.c.b16 %v1434, %v1426
    %v1811 = vpack.c.b16 %v1435, %v1427
    %v1812 = vpack.c.b16 %v1436, %v1428
    %v1813 = vpack.c.b16 %v1437, %v1429
    %v1814 = vpack.c.b16 %v1438, %v1430
    %v1815 = vpack.c.b16 %v1439, %v1431
    %v1816 = vpack.c.b16 %v1440, %v1432
    %v1817 = vpack.c.b16 %v1441, %v1433
    %v1818 = vpack.c.b16 %v1450, %v1442
    %v1819 = vpack.c.b16 %v1451, %v1443
    %v1820 = vpack.c.b16 %v1452, %v1444
    %v1821 = vpack.c.b16 %v1453, %v1445
    %v1822 = vpack.c.b16 %v1454, %v1446
    %v1823 = vpack.c.b16 %v1455, %v1447
    %v1824 = vpack.c.b16 %v1456, %v1448
    %v1825 = vpack.c.b16 %v1457, %v1449
    %v1826 = vpack.c.b16 %v1466, %v1458
    %v1827 = vpack.c.b16 %v1467, %v1459
    %v1828 = vpack.c.b16 %v1468, %v1460
    %v1829 = vpack.c.b16 %v1469, %v1461
    %v1830 = vpack.c.b16 %v1470, %v1462
    %v1831 = vpack.c.b16 %v1471, %v1463
    %v1832 = vpack.c.b16 %v1472, %v1464
    %v1833 = vpack.c.b16 %v1473, %v1465
    %v1834 = vpack.c.b16 %v1482, %v1474
    %v1835 = vpack.c.b16 %v1483, %v1475
    %v1836 = vpack.c.b16 %v1484, %v1476
    %v1837 = vpack.c.b16 %v1485, %v1477
    %v1838 = vpack.c.b16 %v1486, %v1478
    %v1839 = vpack.c.b16 %v1487, %v1479
    %v1840 = vpack.c.b16 %v1488, %v1480
    %v1841 = vpack.c.b16 %v1489, %v1481
    %v1842 = vpack.c.b16 %v1498, %v1490
    %v1843 = vpack.c.b16 %v1499, %v1491
    %v1844 = vpack.c.b16 %v1500, %v1492
    %v1845 = vpack.c.b16 %v1501, %v1493
    %v1846 = vpack.c.b16 %v1502, %v1494
    %v1847 = vpack.c.b16 %v1503, %v1495
    %v1848 = vpack.c.b16 %v1504, %v1496
    %v1849 = vpack.c.b16 %v1505, %v1497
    %v1850 = vpack.c.b16 %v1514, %v1506
    %v1851 = vpack.c.b16 %v1515, %v1507
    %v1852 = vpack.c.b16 %v1516, %v1508
    %v1853 = vpack.c.b16 %v1517, %v1509
    %v1854 = vpack.c.b16 %v1518, %v1510
    %v1855 = vpack.c.b16 %v1519, %v1511
    %v1856 = vpack.c.b16 %v1520, %v1512
    %v1857 = vpack.c.b16 %v1521, %v1513
    %v1858 = vpack.c.b16 %v1530, %v1522
    %v1859 = vpack.c.b16 %v1531, %v1523
    %v1860 = vpack.c.b16 %v1532, %v1524
    %v1861 = vpack.c.b16 %v1533, %v1525
    %v1862 = vpack.c.b16 %v1534, %v1526
    %v1863 = vpack.c.b16 %v1535, %v1527
    %v1864 = vpack.c.b16 %v1536, %v1528
    %v1865 = vpack.c.b16 %v1537, %v1529
    %v1866 = vpack.c.b16 %v1546, %v1538
    %v1867 = vpack.c.b16 %v1547, %v1539
    %v1868 = vpack.c.b16 %v1548, %v1540
    %v1869 = vpack.c.b16 %v1549, %v1541
    %v1870 = vpack.c.b16 %v1550, %v1542
    %v1871 = vpack.c.b16 %v1551, %v1543
    %v1872 = vpack.c.b16 %v1552, %v1544
    %v1873 = vpack.c.b16 %v1553, %v1545
    %v1874 = vpack.c.b16 %v1562, %v1554
    %v1875 = vpack.c.b16 %v1563, %v1555
    %v1876 = vpack.c.b16 %v1564, %v1556
    %v1877 = vpack.c.b16 %v1565, %v1557
    %v1878 = vpack.c.b16 %v1566, %v1558
    %v1879 = vpack.c.b16 %v1567, %v1559
    %v1880 = vpack.c.b16 %v1568, %v1560
    %v1881 = vpack.c.b16 %v1569, %v1561
    %v1882 = vpack.c.b16 %v1578, %v1570
    %v1883 = vpack.c.b16 %v1579, %v1571
    %v1884 = vpack.c.b16 %v1580, %v1572
    %v1885 = vpack.c.b16 %v1581, %v1573
    %v1886 = vpack.c.b16 %v1582, %v1574
    %v1887 = vpack.c.b16 %v1583, %v1575
    %v1888 = vpack.c.b16 %v1584, %v1576
    %v1889 = vpack.c.b16 %v1585, %v1577
    %v1890 = vpack.c.b16 %v1594, %v1586
    %v1891 = vpack.c.b16 %v1595, %v1587
    %v1892 = vpack.c.b16 %v1596, %v1588
    %v1893 = vpack.c.b16 %v1597, %v1589
    %v1894 = vpack.c.b16 %v1598, %v1590
    %v1895 = vpack.c.b16 %v1599, %v1591
    %v1896 = vpack.c.b16 %v1600, %v1592
    %v1897 = vpack.c.b16 %v1601, %v1593
    %v1898 = vpack.c.b16 %v1610, %v1602
    %v1899 = vpack.c.b16 %v1611, %v1603
    %v1900 = vpack.c.b16 %v1612, %v1604
    %v1901 = vpack.c.b16 %v1613, %v1605
    %v1902 = vpack.c.b16 %v1614, %v1606
    %v1903 = vpack.c.b16 %v1615, %v1607
    %v1904 = vpack.c.b16 %v1616, %v1608
    %v1905 = vpack.c.b16 %v1617, %v1609
    %v1906 = vpack.c.b16 %v1626, %v1618
    %v1907 = vpack.c.b16 %v1627, %v1619
    %v1908 = vpack.c.b16 %v1628, %v1620
    %v1909 = vpack.c.b16 %v1629, %v1621
    %v1910 = vpack.c.b16 %v1630, %v1622
    %v1911 = vpack.c.b16 %v1631, %v1623
    %v1912 = vpack.c.b16 %v1632, %v1624
    %v1913 = vpack.c.b16 %v1633, %v1625
    %v1914 = vpack.c.b16 %v1642, %v1634
    %v1915 = vpack.c.b16 %v1643, %v1635
    %v1916 = vpack.c.b16 %v1644, %v1636
    %v1917 = vpack.c.b16 %v1645, %v1637
    %v1918 = vpack.c.b16 %v1646, %v1638
    %v1919 = vpack.c.b16 %v1647, %v1639
    %v1920 = vpack.c.b16 %v1648, %v1640
    %v1921 = vpack.c.b16 %v1649, %v1641
    %v1922 = vpack.c.b16 %v1658, %v1650
    %v1923 = vpack.c.b16 %v1659, %v1651
    %v1924 = vpack.c.b16 %v1660, %v1652
    %v1925 = vpack.c.b16 %v1661, %v1653
    %v1926 = vpack.c.b16 %v1662, %v1654
    %v1927 = vpack.c.b16 %v1663, %v1655
    %v1928 = vpack.c.b16 %v1664, %v1656
    %v1929 = vpack.c.b16 %v1665, %v1657
    %v1930 = vpack.c.b16 %v1674, %v1666
    %v1931 = vpack.c.b16 %v1675, %v1667
    %v1932 = vpack.c.b16 %v1676, %v1668
    %v1933 = vpack.c.b16 %v1677, %v1669
    %v1934 = vpack.c.b16 %v1678, %v1670
    %v1935 = vpack.c.b16 %v1679, %v1671
    %v1936 = vpack.c.b16 %v1680, %v1672
    %v1937 = vpack.c.b16 %v1681, %v1673
    %2194 = vmatprep.subr.bf16.mxu0 %v1739
    %2195 = vmatpush1.bf16.msra.mxu0 %v1738
    %2196 = vmatprep.subr.bf16.mxu0 %v1731
    %2197 = vmatpush1.bf16.msra.mxu0 %v1730
    %2198 = vmatprep.subr.bf16.mxu0 %v1723
    %2199 = vmatpush1.bf16.msra.mxu0 %v1722
    %2200 = vmatprep.subr.bf16.mxu0 %v1715
    %2201 = vmatpush1.bf16.msra.mxu0 %v1714
    %2202 = vmatprep.subr.bf16.mxu0 %v1707
    %2203 = vmatpush1.bf16.msra.mxu0 %v1706
    %2204 = vmatprep.subr.bf16.mxu0 %v1699
    %2205 = vmatpush1.bf16.msra.mxu0 %v1698
    %2206 = vmatprep.subr.bf16.mxu0 %v1691
    %2207 = vmatpush1.bf16.msra.mxu0 %v1690
    %2208 = vmatprep.subr.bf16.mxu0 %v1683
    %2209 = vmatpush1.bf16.msra.mxu0 %v1682
    %2210 = vmatprep.subr.bf16.mxu0 %v1803
    %2211 = vmatpush2.bf16.msra.mxu0 %v1802
    %2212 = vmatprep.subr.bf16.mxu0 %v1795
    %2213 = vmatpush2.bf16.msra.mxu0 %v1794
    %2214 = vmatprep.subr.bf16.mxu0 %v1787
    %2215 = vmatpush2.bf16.msra.mxu0 %v1786
    %2216 = vmatprep.subr.bf16.mxu0 %v1779
    %2217 = vmatpush2.bf16.msra.mxu0 %v1778
    %2218 = vmatprep.subr.bf16.mxu0 %v1771
    %2219 = vmatpush2.bf16.msra.mxu0 %v1770
    %2220 = vmatprep.subr.bf16.mxu0 %v1763
    %2221 = vmatpush2.bf16.msra.mxu0 %v1762
    %2222 = vmatprep.subr.bf16.mxu0 %v1755
    %2223 = vmatpush2.bf16.msra.mxu0 %v1754
    %2224 = vmatprep.subr.bf16.mxu0 %v1747
    %2225 = vmatpush2.bf16.msra.mxu0 %v1746
    %2226 = vmatprep.mubr.bf16.mxu0 %v613
    %2227 = vmatmul.mubr.bf16.gmra.mxu0 %v612
    %v2228 = vpop.f32.mrf.mxu0
    %v2229 = vadd.f32 %v877, %v2228
    %v2230 = vpop.f32.mrf.mxu0
    %v2231 = vadd.f32 %v881, %v2230
    %v2232 = vpop.f32.mrf.mxu0
    %v2233 = vpop.f32.mrf.mxu0
    %2234 = vdwg.mxu0
    %2235 = vmatprep.subr.bf16.mxu0 %v1867
    %2236 = vmatpush1.bf16.msra.mxu0 %v1866
    %2237 = vmatprep.subr.bf16.mxu0 %v1859
    %2238 = vmatpush1.bf16.msra.mxu0 %v1858
    %2239 = vmatprep.subr.bf16.mxu0 %v1851
    %2240 = vmatpush1.bf16.msra.mxu0 %v1850
    %2241 = vmatprep.subr.bf16.mxu0 %v1843
    %2242 = vmatpush1.bf16.msra.mxu0 %v1842
    %2243 = vmatprep.subr.bf16.mxu0 %v1835
    %2244 = vmatpush1.bf16.msra.mxu0 %v1834
    %2245 = vmatprep.subr.bf16.mxu0 %v1827
    %2246 = vmatpush1.bf16.msra.mxu0 %v1826
    %2247 = vmatprep.subr.bf16.mxu0 %v1819
    %2248 = vmatpush1.bf16.msra.mxu0 %v1818
    %2249 = vmatprep.subr.bf16.mxu0 %v1811
    %2250 = vmatpush1.bf16.msra.mxu0 %v1810
    %2251 = vmatprep.subr.bf16.mxu0 %v1931
    %2252 = vmatpush2.bf16.msra.mxu0 %v1930
    %2253 = vmatprep.subr.bf16.mxu0 %v1923
    %2254 = vmatpush2.bf16.msra.mxu0 %v1922
    %2255 = vmatprep.subr.bf16.mxu0 %v1915
    %2256 = vmatpush2.bf16.msra.mxu0 %v1914
    %2257 = vmatprep.subr.bf16.mxu0 %v1907
    %2258 = vmatpush2.bf16.msra.mxu0 %v1906
    %2259 = vmatprep.subr.bf16.mxu0 %v1899
    %2260 = vmatpush2.bf16.msra.mxu0 %v1898
    %2261 = vmatprep.subr.bf16.mxu0 %v1891
    %2262 = vmatpush2.bf16.msra.mxu0 %v1890
    %2263 = vmatprep.subr.bf16.mxu0 %v1883
    %2264 = vmatpush2.bf16.msra.mxu0 %v1882
    %2265 = vmatprep.subr.bf16.mxu0 %v1875
    %2266 = vmatpush2.bf16.msra.mxu0 %v1874
    %2267 = vmatprep.mubr.bf16.mxu0 %v615
    %2268 = vmatmul.mubr.bf16.gmra.mxu0 %v614
    %v2269 = vpop.f32.mrf.mxu0
    %v2270 = vadd.f32 %v2229, %v2269
    %v2271 = vpop.f32.mrf.mxu0
    %v2272 = vadd.f32 %v2231, %v2271
    %v2273 = vpop.f32.mrf.mxu0
    %v2274 = vpop.f32.mrf.mxu0
    %2275 = vdwg.mxu0
    %2276 = vmatprep.subr.bf16.mxu0 %v1741
    %2277 = vmatpush1.bf16.msra.mxu0 %v1740
    %2278 = vmatprep.subr.bf16.mxu0 %v1733
    %2279 = vmatpush1.bf16.msra.mxu0 %v1732
    %2280 = vmatprep.subr.bf16.mxu0 %v1725
    %2281 = vmatpush1.bf16.msra.mxu0 %v1724
    %2282 = vmatprep.subr.bf16.mxu0 %v1717
    %2283 = vmatpush1.bf16.msra.mxu0 %v1716
    %2284 = vmatprep.subr.bf16.mxu0 %v1709
    %2285 = vmatpush1.bf16.msra.mxu0 %v1708
    %2286 = vmatprep.subr.bf16.mxu0 %v1701
    %2287 = vmatpush1.bf16.msra.mxu0 %v1700
    %2288 = vmatprep.subr.bf16.mxu0 %v1693
    %2289 = vmatpush1.bf16.msra.mxu0 %v1692
    %2290 = vmatprep.subr.bf16.mxu0 %v1685
    %2291 = vmatpush1.bf16.msra.mxu0 %v1684
    %2292 = vmatprep.subr.bf16.mxu0 %v1805
    %2293 = vmatpush2.bf16.msra.mxu0 %v1804
    %2294 = vmatprep.subr.bf16.mxu0 %v1797
    %2295 = vmatpush2.bf16.msra.mxu0 %v1796
    %2296 = vmatprep.subr.bf16.mxu0 %v1789
    %2297 = vmatpush2.bf16.msra.mxu0 %v1788
    %2298 = vmatprep.subr.bf16.mxu0 %v1781
    %2299 = vmatpush2.bf16.msra.mxu0 %v1780
    %2300 = vmatprep.subr.bf16.mxu0 %v1773
    %2301 = vmatpush2.bf16.msra.mxu0 %v1772
    %2302 = vmatprep.subr.bf16.mxu0 %v1765
    %2303 = vmatpush2.bf16.msra.mxu0 %v1764
    %2304 = vmatprep.subr.bf16.mxu0 %v1757
    %2305 = vmatpush2.bf16.msra.mxu0 %v1756
    %2306 = vmatprep.subr.bf16.mxu0 %v1749
    %2307 = vmatpush2.bf16.msra.mxu0 %v1748
    %2308 = vmatprep.mubr.bf16.mxu0 %v613
    %2309 = vmatmul.mubr.bf16.gmra.mxu0 %v612
    %v2310 = vpop.f32.mrf.mxu0
    %v2311 = vadd.f32 %v885, %v2310
    %v2312 = vpop.f32.mrf.mxu0
    %v2313 = vadd.f32 %v889, %v2312
    %v2314 = vpop.f32.mrf.mxu0
    %v2315 = vpop.f32.mrf.mxu0
    %2316 = vdwg.mxu0
    %2317 = vmatprep.subr.bf16.mxu0 %v1869
    %2318 = vmatpush1.bf16.msra.mxu0 %v1868
    %2319 = vmatprep.subr.bf16.mxu0 %v1861
    %2320 = vmatpush1.bf16.msra.mxu0 %v1860
    %2321 = vmatprep.subr.bf16.mxu0 %v1853
    %2322 = vmatpush1.bf16.msra.mxu0 %v1852
    %2323 = vmatprep.subr.bf16.mxu0 %v1845
    %2324 = vmatpush1.bf16.msra.mxu0 %v1844
    %2325 = vmatprep.subr.bf16.mxu0 %v1837
    %2326 = vmatpush1.bf16.msra.mxu0 %v1836
    %2327 = vmatprep.subr.bf16.mxu0 %v1829
    %2328 = vmatpush1.bf16.msra.mxu0 %v1828
    %2329 = vmatprep.subr.bf16.mxu0 %v1821
    %2330 = vmatpush1.bf16.msra.mxu0 %v1820
    %2331 = vmatprep.subr.bf16.mxu0 %v1813
    %2332 = vmatpush1.bf16.msra.mxu0 %v1812
    %2333 = vmatprep.subr.bf16.mxu0 %v1933
    %2334 = vmatpush2.bf16.msra.mxu0 %v1932
    %2335 = vmatprep.subr.bf16.mxu0 %v1925
    %2336 = vmatpush2.bf16.msra.mxu0 %v1924
    %2337 = vmatprep.subr.bf16.mxu0 %v1917
    %2338 = vmatpush2.bf16.msra.mxu0 %v1916
    %2339 = vmatprep.subr.bf16.mxu0 %v1909
    %2340 = vmatpush2.bf16.msra.mxu0 %v1908
    %2341 = vmatprep.subr.bf16.mxu0 %v1901
    %2342 = vmatpush2.bf16.msra.mxu0 %v1900
    %2343 = vmatprep.subr.bf16.mxu0 %v1893
    %2344 = vmatpush2.bf16.msra.mxu0 %v1892
    %2345 = vmatprep.subr.bf16.mxu0 %v1885
    %2346 = vmatpush2.bf16.msra.mxu0 %v1884
    %2347 = vmatprep.subr.bf16.mxu0 %v1877
    %2348 = vmatpush2.bf16.msra.mxu0 %v1876
    %2349 = vmatprep.mubr.bf16.mxu0 %v615
    %2350 = vmatmul.mubr.bf16.gmra.mxu0 %v614
    %v2351 = vpop.f32.mrf.mxu0
    %v2352 = vadd.f32 %v2311, %v2351
    %v2353 = vpop.f32.mrf.mxu0
    %v2354 = vadd.f32 %v2313, %v2353
    %v2355 = vpop.f32.mrf.mxu0
    %v2356 = vpop.f32.mrf.mxu0
    %2357 = vdwg.mxu0
    %2358 = vmatprep.subr.bf16.mxu0 %v1743
    %2359 = vmatpush1.bf16.msra.mxu0 %v1742
    %2360 = vmatprep.subr.bf16.mxu0 %v1735
    %2361 = vmatpush1.bf16.msra.mxu0 %v1734
    %2362 = vmatprep.subr.bf16.mxu0 %v1727
    %2363 = vmatpush1.bf16.msra.mxu0 %v1726
    %2364 = vmatprep.subr.bf16.mxu0 %v1719
    %2365 = vmatpush1.bf16.msra.mxu0 %v1718
    %2366 = vmatprep.subr.bf16.mxu0 %v1711
    %2367 = vmatpush1.bf16.msra.mxu0 %v1710
    %2368 = vmatprep.subr.bf16.mxu0 %v1703
    %2369 = vmatpush1.bf16.msra.mxu0 %v1702
    %2370 = vmatprep.subr.bf16.mxu0 %v1695
    %2371 = vmatpush1.bf16.msra.mxu0 %v1694
    %2372 = vmatprep.subr.bf16.mxu0 %v1687
    %2373 = vmatpush1.bf16.msra.mxu0 %v1686
    %2374 = vmatprep.subr.bf16.mxu0 %v1807
    %2375 = vmatpush2.bf16.msra.mxu0 %v1806
    %2376 = vmatprep.subr.bf16.mxu0 %v1799
    %2377 = vmatpush2.bf16.msra.mxu0 %v1798
    %2378 = vmatprep.subr.bf16.mxu0 %v1791
    %2379 = vmatpush2.bf16.msra.mxu0 %v1790
    %2380 = vmatprep.subr.bf16.mxu0 %v1783
    %2381 = vmatpush2.bf16.msra.mxu0 %v1782
    %2382 = vmatprep.subr.bf16.mxu0 %v1775
    %2383 = vmatpush2.bf16.msra.mxu0 %v1774
    %2384 = vmatprep.subr.bf16.mxu0 %v1767
    %2385 = vmatpush2.bf16.msra.mxu0 %v1766
    %2386 = vmatprep.subr.bf16.mxu0 %v1759
    %2387 = vmatpush2.bf16.msra.mxu0 %v1758
    %2388 = vmatprep.subr.bf16.mxu0 %v1751
    %2389 = vmatpush2.bf16.msra.mxu0 %v1750
    %2390 = vmatprep.mubr.bf16.mxu0 %v613
    %2391 = vmatmul.mubr.bf16.gmra.mxu0 %v612
    %v2392 = vpop.f32.mrf.mxu0
    %v2393 = vadd.f32 %v893, %v2392
    %v2394 = vpop.f32.mrf.mxu0
    %v2395 = vadd.f32 %v897, %v2394
    %v2396 = vpop.f32.mrf.mxu0
    %v2397 = vpop.f32.mrf.mxu0
    %2398 = vdwg.mxu0
    %2399 = vmatprep.subr.bf16.mxu0 %v1871
    %2400 = vmatpush1.bf16.msra.mxu0 %v1870
    %2401 = vmatprep.subr.bf16.mxu0 %v1863
    %2402 = vmatpush1.bf16.msra.mxu0 %v1862
    %2403 = vmatprep.subr.bf16.mxu0 %v1855
    %2404 = vmatpush1.bf16.msra.mxu0 %v1854
    %2405 = vmatprep.subr.bf16.mxu0 %v1847
    %2406 = vmatpush1.bf16.msra.mxu0 %v1846
    %2407 = vmatprep.subr.bf16.mxu0 %v1839
    %2408 = vmatpush1.bf16.msra.mxu0 %v1838
    %2409 = vmatprep.subr.bf16.mxu0 %v1831
    %2410 = vmatpush1.bf16.msra.mxu0 %v1830
    %2411 = vmatprep.subr.bf16.mxu0 %v1823
    %2412 = vmatpush1.bf16.msra.mxu0 %v1822
    %2413 = vmatprep.subr.bf16.mxu0 %v1815
    %2414 = vmatpush1.bf16.msra.mxu0 %v1814
    %2415 = vmatprep.subr.bf16.mxu0 %v1935
    %2416 = vmatpush2.bf16.msra.mxu0 %v1934
    %2417 = vmatprep.subr.bf16.mxu0 %v1927
    %2418 = vmatpush2.bf16.msra.mxu0 %v1926
    %2419 = vmatprep.subr.bf16.mxu0 %v1919
    %2420 = vmatpush2.bf16.msra.mxu0 %v1918
    %2421 = vmatprep.subr.bf16.mxu0 %v1911
    %2422 = vmatpush2.bf16.msra.mxu0 %v1910
    %2423 = vmatprep.subr.bf16.mxu0 %v1903
    %2424 = vmatpush2.bf16.msra.mxu0 %v1902
    %2425 = vmatprep.subr.bf16.mxu0 %v1895
    %2426 = vmatpush2.bf16.msra.mxu0 %v1894
    %2427 = vmatprep.subr.bf16.mxu0 %v1887
    %2428 = vmatpush2.bf16.msra.mxu0 %v1886
    %2429 = vmatprep.subr.bf16.mxu0 %v1879
    %2430 = vmatpush2.bf16.msra.mxu0 %v1878
    %2431 = vmatprep.mubr.bf16.mxu0 %v615
    %2432 = vmatmul.mubr.bf16.gmra.mxu0 %v614
    %v2433 = vpop.f32.mrf.mxu0
    %v2434 = vadd.f32 %v2393, %v2433
    %v2435 = vpop.f32.mrf.mxu0
    %v2436 = vadd.f32 %v2395, %v2435
    %v2437 = vpop.f32.mrf.mxu0
    %v2438 = vpop.f32.mrf.mxu0
    %2439 = vdwg.mxu0
    %2440 = vmatprep.subr.bf16.mxu0 %v1745
    %2441 = vmatpush1.bf16.msra.mxu0 %v1744
    %2442 = vmatprep.subr.bf16.mxu0 %v1737
    %2443 = vmatpush1.bf16.msra.mxu0 %v1736
    %2444 = vmatprep.subr.bf16.mxu0 %v1729
    %2445 = vmatpush1.bf16.msra.mxu0 %v1728
    %2446 = vmatprep.subr.bf16.mxu0 %v1721
    %2447 = vmatpush1.bf16.msra.mxu0 %v1720
    %2448 = vmatprep.subr.bf16.mxu0 %v1713
    %2449 = vmatpush1.bf16.msra.mxu0 %v1712
    %2450 = vmatprep.subr.bf16.mxu0 %v1705
    %2451 = vmatpush1.bf16.msra.mxu0 %v1704
    %2452 = vmatprep.subr.bf16.mxu0 %v1697
    %2453 = vmatpush1.bf16.msra.mxu0 %v1696
    %2454 = vmatprep.subr.bf16.mxu0 %v1689
    %2455 = vmatpush1.bf16.msra.mxu0 %v1688
    %2456 = vmatprep.subr.bf16.mxu0 %v1809
    %2457 = vmatpush2.bf16.msra.mxu0 %v1808
    %2458 = vmatprep.subr.bf16.mxu0 %v1801
    %2459 = vmatpush2.bf16.msra.mxu0 %v1800
    %2460 = vmatprep.subr.bf16.mxu0 %v1793
    %2461 = vmatpush2.bf16.msra.mxu0 %v1792
    %2462 = vmatprep.subr.bf16.mxu0 %v1785
    %2463 = vmatpush2.bf16.msra.mxu0 %v1784
    %2464 = vmatprep.subr.bf16.mxu0 %v1777
    %2465 = vmatpush2.bf16.msra.mxu0 %v1776
    %2466 = vmatprep.subr.bf16.mxu0 %v1769
    %2467 = vmatpush2.bf16.msra.mxu0 %v1768
    %2468 = vmatprep.subr.bf16.mxu0 %v1761
    %2469 = vmatpush2.bf16.msra.mxu0 %v1760
    %2470 = vmatprep.subr.bf16.mxu0 %v1753
    %2471 = vmatpush2.bf16.msra.mxu0 %v1752
    %2472 = vmatprep.mubr.bf16.mxu0 %v613
    %2473 = vmatmul.mubr.bf16.gmra.mxu0 %v612
    %v2474 = vpop.f32.mrf.mxu0
    %v2475 = vadd.f32 %v901, %v2474
    %v2476 = vpop.f32.mrf.mxu0
    %v2477 = vadd.f32 %v905, %v2476
    %v2478 = vpop.f32.mrf.mxu0
    %v2479 = vpop.f32.mrf.mxu0
    %2480 = vdwg.mxu0
    %2481 = vmatprep.subr.bf16.mxu0 %v1873
    %2482 = vmatpush1.bf16.msra.mxu0 %v1872
    %2483 = vmatprep.subr.bf16.mxu0 %v1865
    %2484 = vmatpush1.bf16.msra.mxu0 %v1864
    %2485 = vmatprep.subr.bf16.mxu0 %v1857
    %2486 = vmatpush1.bf16.msra.mxu0 %v1856
    %2487 = vmatprep.subr.bf16.mxu0 %v1849
    %2488 = vmatpush1.bf16.msra.mxu0 %v1848
    %2489 = vmatprep.subr.bf16.mxu0 %v1841
    %2490 = vmatpush1.bf16.msra.mxu0 %v1840
    %2491 = vmatprep.subr.bf16.mxu0 %v1833
    %2492 = vmatpush1.bf16.msra.mxu0 %v1832
    %2493 = vmatprep.subr.bf16.mxu0 %v1825
    %2494 = vmatpush1.bf16.msra.mxu0 %v1824
    %2495 = vmatprep.subr.bf16.mxu0 %v1817
    %2496 = vmatpush1.bf16.msra.mxu0 %v1816
    %2497 = vmatprep.subr.bf16.mxu0 %v1937
    %2498 = vmatpush2.bf16.msra.mxu0 %v1936
    %2499 = vmatprep.subr.bf16.mxu0 %v1929
    %2500 = vmatpush2.bf16.msra.mxu0 %v1928
    %2501 = vmatprep.subr.bf16.mxu0 %v1921
    %2502 = vmatpush2.bf16.msra.mxu0 %v1920
    %2503 = vmatprep.subr.bf16.mxu0 %v1913
    %2504 = vmatpush2.bf16.msra.mxu0 %v1912
    %2505 = vmatprep.subr.bf16.mxu0 %v1905
    %2506 = vmatpush2.bf16.msra.mxu0 %v1904
    %2507 = vmatprep.subr.bf16.mxu0 %v1897
    %2508 = vmatpush2.bf16.msra.mxu0 %v1896
    %2509 = vmatprep.subr.bf16.mxu0 %v1889
    %2510 = vmatpush2.bf16.msra.mxu0 %v1888
    %2511 = vmatprep.subr.bf16.mxu0 %v1881
    %2512 = vmatpush2.bf16.msra.mxu0 %v1880
    %2513 = vmatprep.mubr.bf16.mxu0 %v615
    %2514 = vmatmul.mubr.bf16.gmra.mxu0 %v614
    %v2515 = vpop.f32.mrf.mxu0
    %v2516 = vadd.f32 %v2475, %v2515
    %v2517 = vpop.f32.mrf.mxu0
    %v2518 = vadd.f32 %v2477, %v2517
    %v2519 = vpop.f32.mrf.mxu0
    %v2520 = vpop.f32.mrf.mxu0
    %2521 = vdwg.mxu0
    %v2522 = vmax.f32 %v2270, 0.0
    %v2523 = vmax.f32 %v2272, 0.0
    %v2524 = vmax.f32 %v2352, 0.0
    %v2525 = vmax.f32 %v2354, 0.0
    %v2526 = vmax.f32 %v2434, 0.0
    %v2527 = vmax.f32 %v2436, 0.0
    %v2528 = vmax.f32 %v2516, 0.0
    %v2529 = vmax.f32 %v2518, 0.0
    %v2530 = vpack.c.bf16 %v2522, %v2522
    %v2531 = vpack.c.bf16 %v2523, %v2523
    %v2532 = vpack.c.bf16 %v2524, %v2524
    %v2533 = vpack.c.bf16 %v2525, %v2525
    %v2534 = vpack.c.bf16 %v2526, %v2526
    %v2535 = vpack.c.bf16 %v2527, %v2527
    %v2536 = vpack.c.bf16 %v2528, %v2528
    %v2537 = vpack.c.bf16 %v2529, %v2529
    %v2538 = vld [vmem:[#allocation11] sm:$0xf]
    %v2539 = vld [vmem:[#allocation11 + $0x4] sm:$0xf]
    %v2540 = vld [vmem:[#allocation11 + $0x8] sm:$0xf]
    %v2541 = vld [vmem:[#allocation11 + $0xc] sm:$0xf]
    %v2542 = vld [vmem:[#allocation11 + $0x10] sm:$0xf]
    %v2543 = vld [vmem:[#allocation11 + $0x14] sm:$0xf]
    %v2544 = vld [vmem:[#allocation11 + $0x18] sm:$0xf]
    %v2545 = vld [vmem:[#allocation11 + $0x1c] sm:$0xf]
    %v2546 = vld [vmem:[#allocation11 + $0x20] sm:$0xf]
    %v2547 = vld [vmem:[#allocation11 + $0x24] sm:$0xf]
    %v2548 = vld [vmem:[#allocation11 + $0x28] sm:$0xf]
    %v2549 = vld [vmem:[#allocation11 + $0x2c] sm:$0xf]
    %v2550 = vld [vmem:[#allocation11 + $0x30] sm:$0xf]
    %v2551 = vld [vmem:[#allocation11 + $0x34] sm:$0xf]
    %v2552 = vld [vmem:[#allocation11 + $0x38] sm:$0xf]
    %v2553 = vld [vmem:[#allocation11 + $0x3c] sm:$0xf]
    %v2554 = vld [vmem:[#allocation11 + $0x40] sm:$0xf]
    %v2555 = vld [vmem:[#allocation11 + $0x44] sm:$0xf]
    %v2556 = vld [vmem:[#allocation11 + $0x48] sm:$0xf]
    %v2557 = vld [vmem:[#allocation11 + $0x4c] sm:$0xf]
    %v2558 = vld [vmem:[#allocation11 + $0x50] sm:$0xf]
    %v2559 = vld [vmem:[#allocation11 + $0x54] sm:$0xf]
    %v2560 = vld [vmem:[#allocation11 + $0x58] sm:$0xf]
    %v2561 = vld [vmem:[#allocation11 + $0x5c] sm:$0xf]
    %v2562 = vld [vmem:[#allocation11 + $0x60] sm:$0xf]
    %v2563 = vld [vmem:[#allocation11 + $0x64] sm:$0xf]
    %v2564 = vld [vmem:[#allocation11 + $0x68] sm:$0xf]
    %v2565 = vld [vmem:[#allocation11 + $0x6c] sm:$0xf]
    %v2566 = vld [vmem:[#allocation11 + $0x70] sm:$0xf]
    %v2567 = vld [vmem:[#allocation11 + $0x74] sm:$0xf]
    %v2568 = vld [vmem:[#allocation11 + $0x78] sm:$0xf]
    %v2569 = vld [vmem:[#allocation11 + $0x7c] sm:$0xf]
    %v2570 = vld [vmem:[#allocation11 + $0x80] sm:$0xf]
    %v2571 = vld [vmem:[#allocation11 + $0x84] sm:$0xf]
    %v2572 = vld [vmem:[#allocation11 + $0x88] sm:$0xf]
    %v2573 = vld [vmem:[#allocation11 + $0x8c] sm:$0xf]
    %v2574 = vld [vmem:[#allocation11 + $0x90] sm:$0xf]
    %v2575 = vld [vmem:[#allocation11 + $0x94] sm:$0xf]
    %v2576 = vld [vmem:[#allocation11 + $0x98] sm:$0xf]
    %v2577 = vld [vmem:[#allocation11 + $0x9c] sm:$0xf]
    %v2578 = vld [vmem:[#allocation11 + $0xa0] sm:$0xf]
    %v2579 = vld [vmem:[#allocation11 + $0xa4] sm:$0xf]
    %v2580 = vld [vmem:[#allocation11 + $0xa8] sm:$0xf]
    %v2581 = vld [vmem:[#allocation11 + $0xac] sm:$0xf]
    %v2582 = vld [vmem:[#allocation11 + $0xb0] sm:$0xf]
    %v2583 = vld [vmem:[#allocation11 + $0xb4] sm:$0xf]
    %v2584 = vld [vmem:[#allocation11 + $0xb8] sm:$0xf]
    %v2585 = vld [vmem:[#allocation11 + $0xbc] sm:$0xf]
    %v2586 = vld [vmem:[#allocation11 + $0xc0] sm:$0xf]
    %v2587 = vld [vmem:[#allocation11 + $0xc4] sm:$0xf]
    %v2588 = vld [vmem:[#allocation11 + $0xc8] sm:$0xf]
    %v2589 = vld [vmem:[#allocation11 + $0xcc] sm:$0xf]
    %v2590 = vld [vmem:[#allocation11 + $0xd0] sm:$0xf]
    %v2591 = vld [vmem:[#allocation11 + $0xd4] sm:$0xf]
    %v2592 = vld [vmem:[#allocation11 + $0xd8] sm:$0xf]
    %v2593 = vld [vmem:[#allocation11 + $0xdc] sm:$0xf]
    %v2594 = vld [vmem:[#allocation11 + $0xe0] sm:$0xf]
    %v2595 = vld [vmem:[#allocation11 + $0xe4] sm:$0xf]
    %v2596 = vld [vmem:[#allocation11 + $0xe8] sm:$0xf]
    %v2597 = vld [vmem:[#allocation11 + $0xec] sm:$0xf]
    %v2598 = vld [vmem:[#allocation11 + $0xf0] sm:$0xf]
    %v2599 = vld [vmem:[#allocation11 + $0xf4] sm:$0xf]
    %v2600 = vld [vmem:[#allocation11 + $0xf8] sm:$0xf]
    %v2601 = vld [vmem:[#allocation11 + $0xfc] sm:$0xf]
    %v2602 = vld [vmem:[#allocation11 + $0x100] sm:$0xf]
    %v2603 = vld [vmem:[#allocation11 + $0x104] sm:$0xf]
    %v2604 = vld [vmem:[#allocation11 + $0x108] sm:$0xf]
    %v2605 = vld [vmem:[#allocation11 + $0x10c] sm:$0xf]
    %v2606 = vld [vmem:[#allocation11 + $0x110] sm:$0xf]
    %v2607 = vld [vmem:[#allocation11 + $0x114] sm:$0xf]
    %v2608 = vld [vmem:[#allocation11 + $0x118] sm:$0xf]
    %v2609 = vld [vmem:[#allocation11 + $0x11c] sm:$0xf]
    %v2610 = vld [vmem:[#allocation11 + $0x120] sm:$0xf]
    %v2611 = vld [vmem:[#allocation11 + $0x124] sm:$0xf]
    %v2612 = vld [vmem:[#allocation11 + $0x128] sm:$0xf]
    %v2613 = vld [vmem:[#allocation11 + $0x12c] sm:$0xf]
    %v2614 = vld [vmem:[#allocation11 + $0x130] sm:$0xf]
    %v2615 = vld [vmem:[#allocation11 + $0x134] sm:$0xf]
    %v2616 = vld [vmem:[#allocation11 + $0x138] sm:$0xf]
    %v2617 = vld [vmem:[#allocation11 + $0x13c] sm:$0xf]
    %v2618 = vld [vmem:[#allocation11 + $0x140] sm:$0xf]
    %v2619 = vld [vmem:[#allocation11 + $0x144] sm:$0xf]
    %v2620 = vld [vmem:[#allocation11 + $0x148] sm:$0xf]
    %v2621 = vld [vmem:[#allocation11 + $0x14c] sm:$0xf]
    %v2622 = vld [vmem:[#allocation11 + $0x150] sm:$0xf]
    %v2623 = vld [vmem:[#allocation11 + $0x154] sm:$0xf]
    %v2624 = vld [vmem:[#allocation11 + $0x158] sm:$0xf]
    %v2625 = vld [vmem:[#allocation11 + $0x15c] sm:$0xf]
    %v2626 = vld [vmem:[#allocation11 + $0x160] sm:$0xf]
    %v2627 = vld [vmem:[#allocation11 + $0x164] sm:$0xf]
    %v2628 = vld [vmem:[#allocation11 + $0x168] sm:$0xf]
    %v2629 = vld [vmem:[#allocation11 + $0x16c] sm:$0xf]
    %v2630 = vld [vmem:[#allocation11 + $0x170] sm:$0xf]
    %v2631 = vld [vmem:[#allocation11 + $0x174] sm:$0xf]
    %v2632 = vld [vmem:[#allocation11 + $0x178] sm:$0xf]
    %v2633 = vld [vmem:[#allocation11 + $0x17c] sm:$0xf]
    %v2634 = vld [vmem:[#allocation11 + $0x180] sm:$0xf]
    %v2635 = vld [vmem:[#allocation11 + $0x184] sm:$0xf]
    %v2636 = vld [vmem:[#allocation11 + $0x188] sm:$0xf]
    %v2637 = vld [vmem:[#allocation11 + $0x18c] sm:$0xf]
    %v2638 = vld [vmem:[#allocation11 + $0x190] sm:$0xf]
    %v2639 = vld [vmem:[#allocation11 + $0x194] sm:$0xf]
    %v2640 = vld [vmem:[#allocation11 + $0x198] sm:$0xf]
    %v2641 = vld [vmem:[#allocation11 + $0x19c] sm:$0xf]
    %v2642 = vld [vmem:[#allocation11 + $0x1a0] sm:$0xf]
    %v2643 = vld [vmem:[#allocation11 + $0x1a4] sm:$0xf]
    %v2644 = vld [vmem:[#allocation11 + $0x1a8] sm:$0xf]
    %v2645 = vld [vmem:[#allocation11 + $0x1ac] sm:$0xf]
    %v2646 = vld [vmem:[#allocation11 + $0x1b0] sm:$0xf]
    %v2647 = vld [vmem:[#allocation11 + $0x1b4] sm:$0xf]
    %v2648 = vld [vmem:[#allocation11 + $0x1b8] sm:$0xf]
    %v2649 = vld [vmem:[#allocation11 + $0x1bc] sm:$0xf]
    %v2650 = vld [vmem:[#allocation11 + $0x1c0] sm:$0xf]
    %v2651 = vld [vmem:[#allocation11 + $0x1c4] sm:$0xf]
    %v2652 = vld [vmem:[#allocation11 + $0x1c8] sm:$0xf]
    %v2653 = vld [vmem:[#allocation11 + $0x1cc] sm:$0xf]
    %v2654 = vld [vmem:[#allocation11 + $0x1d0] sm:$0xf]
    %v2655 = vld [vmem:[#allocation11 + $0x1d4] sm:$0xf]
    %v2656 = vld [vmem:[#allocation11 + $0x1d8] sm:$0xf]
    %v2657 = vld [vmem:[#allocation11 + $0x1dc] sm:$0xf]
    %v2658 = vld [vmem:[#allocation11 + $0x1e0] sm:$0xf]
    %v2659 = vld [vmem:[#allocation11 + $0x1e4] sm:$0xf]
    %v2660 = vld [vmem:[#allocation11 + $0x1e8] sm:$0xf]
    %v2661 = vld [vmem:[#allocation11 + $0x1ec] sm:$0xf]
    %v2662 = vld [vmem:[#allocation11 + $0x1f0] sm:$0xf]
    %v2663 = vld [vmem:[#allocation11 + $0x1f4] sm:$0xf]
    %v2664 = vld [vmem:[#allocation11 + $0x1f8] sm:$0xf]
    %v2665 = vld [vmem:[#allocation11 + $0x1fc] sm:$0xf]
    %v2666 = vld [vmem:[%s5] sm:$0x1]
    %v2668 = vlaneseq
    %v2669 = vshrl.u32 %v2668, 7
    %v2670 = vsub.s32 0, %v2669
    %v2671 = vrot.slane %v2666, %v2670
    %v2801 = vunpack.c.l.b16 %v2538
    %v2802 = vunpack.c.l.b16 %v2539
    %v2803 = vunpack.c.l.b16 %v2540
    %v2804 = vunpack.c.l.b16 %v2541
    %v2805 = vunpack.c.l.b16 %v2542
    %v2806 = vunpack.c.l.b16 %v2543
    %v2807 = vunpack.c.l.b16 %v2544
    %v2808 = vunpack.c.l.b16 %v2545
    %v2809 = vunpack.c.l.b16 %v2546
    %v2810 = vunpack.c.l.b16 %v2547
    %v2811 = vunpack.c.l.b16 %v2548
    %v2812 = vunpack.c.l.b16 %v2549
    %v2813 = vunpack.c.l.b16 %v2550
    %v2814 = vunpack.c.l.b16 %v2551
    %v2815 = vunpack.c.l.b16 %v2552
    %v2816 = vunpack.c.l.b16 %v2553
    %v2817 = vunpack.c.l.b16 %v2554
    %v2818 = vunpack.c.l.b16 %v2555
    %v2819 = vunpack.c.l.b16 %v2556
    %v2820 = vunpack.c.l.b16 %v2557
    %v2821 = vunpack.c.l.b16 %v2558
    %v2822 = vunpack.c.l.b16 %v2559
    %v2823 = vunpack.c.l.b16 %v2560
    %v2824 = vunpack.c.l.b16 %v2561
    %v2825 = vunpack.c.l.b16 %v2562
    %v2826 = vunpack.c.l.b16 %v2563
    %v2827 = vunpack.c.l.b16 %v2564
    %v2828 = vunpack.c.l.b16 %v2565
    %v2829 = vunpack.c.l.b16 %v2566
    %v2830 = vunpack.c.l.b16 %v2567
    %v2831 = vunpack.c.l.b16 %v2568
    %v2832 = vunpack.c.l.b16 %v2569
    %v2833 = vunpack.c.l.b16 %v2570
    %v2834 = vunpack.c.l.b16 %v2571
    %v2835 = vunpack.c.l.b16 %v2572
    %v2836 = vunpack.c.l.b16 %v2573
    %v2837 = vunpack.c.l.b16 %v2574
    %v2838 = vunpack.c.l.b16 %v2575
    %v2839 = vunpack.c.l.b16 %v2576
    %v2840 = vunpack.c.l.b16 %v2577
    %v2841 = vunpack.c.l.b16 %v2578
    %v2842 = vunpack.c.l.b16 %v2579
    %v2843 = vunpack.c.l.b16 %v2580
    %v2844 = vunpack.c.l.b16 %v2581
    %v2845 = vunpack.c.l.b16 %v2582
    %v2846 = vunpack.c.l.b16 %v2583
    %v2847 = vunpack.c.l.b16 %v2584
    %v2848 = vunpack.c.l.b16 %v2585
    %v2849 = vunpack.c.l.b16 %v2586
    %v2850 = vunpack.c.l.b16 %v2587
    %v2851 = vunpack.c.l.b16 %v2588
    %v2852 = vunpack.c.l.b16 %v2589
    %v2853 = vunpack.c.l.b16 %v2590
    %v2854 = vunpack.c.l.b16 %v2591
    %v2855 = vunpack.c.l.b16 %v2592
    %v2856 = vunpack.c.l.b16 %v2593
    %v2857 = vunpack.c.l.b16 %v2594
    %v2858 = vunpack.c.l.b16 %v2595
    %v2859 = vunpack.c.l.b16 %v2596
    %v2860 = vunpack.c.l.b16 %v2597
    %v2861 = vunpack.c.l.b16 %v2598
    %v2862 = vunpack.c.l.b16 %v2599
    %v2863 = vunpack.c.l.b16 %v2600
    %v2864 = vunpack.c.l.b16 %v2601
    %v2865 = vunpack.c.l.b16 %v2602
    %v2866 = vunpack.c.l.b16 %v2603
    %v2867 = vunpack.c.l.b16 %v2604
    %v2868 = vunpack.c.l.b16 %v2605
    %v2869 = vunpack.c.l.b16 %v2606
    %v2870 = vunpack.c.l.b16 %v2607
    %v2871 = vunpack.c.l.b16 %v2608
    %v2872 = vunpack.c.l.b16 %v2609
    %v2873 = vunpack.c.l.b16 %v2610
    %v2874 = vunpack.c.l.b16 %v2611
    %v2875 = vunpack.c.l.b16 %v2612
    %v2876 = vunpack.c.l.b16 %v2613
    %v2877 = vunpack.c.l.b16 %v2614
    %v2878 = vunpack.c.l.b16 %v2615
    %v2879 = vunpack.c.l.b16 %v2616
    %v2880 = vunpack.c.l.b16 %v2617
    %v2881 = vunpack.c.l.b16 %v2618
    %v2882 = vunpack.c.l.b16 %v2619
    %v2883 = vunpack.c.l.b16 %v2620
    %v2884 = vunpack.c.l.b16 %v2621
    %v2885 = vunpack.c.l.b16 %v2622
    %v2886 = vunpack.c.l.b16 %v2623
    %v2887 = vunpack.c.l.b16 %v2624
    %v2888 = vunpack.c.l.b16 %v2625
    %v2889 = vunpack.c.l.b16 %v2626
    %v2890 = vunpack.c.l.b16 %v2627
    %v2891 = vunpack.c.l.b16 %v2628
    %v2892 = vunpack.c.l.b16 %v2629
    %v2893 = vunpack.c.l.b16 %v2630
    %v2894 = vunpack.c.l.b16 %v2631
    %v2895 = vunpack.c.l.b16 %v2632
    %v2896 = vunpack.c.l.b16 %v2633
    %v2897 = vunpack.c.l.b16 %v2634
    %v2898 = vunpack.c.l.b16 %v2635
    %v2899 = vunpack.c.l.b16 %v2636
    %v2900 = vunpack.c.l.b16 %v2637
    %v2901 = vunpack.c.l.b16 %v2638
    %v2902 = vunpack.c.l.b16 %v2639
    %v2903 = vunpack.c.l.b16 %v2640
    %v2904 = vunpack.c.l.b16 %v2641
    %v2905 = vunpack.c.l.b16 %v2642
    %v2906 = vunpack.c.l.b16 %v2643
    %v2907 = vunpack.c.l.b16 %v2644
    %v2908 = vunpack.c.l.b16 %v2645
    %v2909 = vunpack.c.l.b16 %v2646
    %v2910 = vunpack.c.l.b16 %v2647
    %v2911 = vunpack.c.l.b16 %v2648
    %v2912 = vunpack.c.l.b16 %v2649
    %v2913 = vunpack.c.l.b16 %v2650
    %v2914 = vunpack.c.l.b16 %v2651
    %v2915 = vunpack.c.l.b16 %v2652
    %v2916 = vunpack.c.l.b16 %v2653
    %v2917 = vunpack.c.l.b16 %v2654
    %v2918 = vunpack.c.l.b16 %v2655
    %v2919 = vunpack.c.l.b16 %v2656
    %v2920 = vunpack.c.l.b16 %v2657
    %v2921 = vunpack.c.l.b16 %v2658
    %v2922 = vunpack.c.l.b16 %v2659
    %v2923 = vunpack.c.l.b16 %v2660
    %v2924 = vunpack.c.l.b16 %v2661
    %v2925 = vunpack.c.l.b16 %v2662
    %v2926 = vunpack.c.l.b16 %v2663
    %v2927 = vunpack.c.l.b16 %v2664
    %v2928 = vunpack.c.l.b16 %v2665
    %v2929 = vpack.c.b16 %v2802, %v2801
    %v2930 = vpack.c.b16 %v2804, %v2803
    %v2931 = vpack.c.b16 %v2806, %v2805
    %v2932 = vpack.c.b16 %v2808, %v2807
    %v2933 = vpack.c.b16 %v2810, %v2809
    %v2934 = vpack.c.b16 %v2812, %v2811
    %v2935 = vpack.c.b16 %v2814, %v2813
    %v2936 = vpack.c.b16 %v2816, %v2815
    %v2937 = vpack.c.b16 %v2818, %v2817
    %v2938 = vpack.c.b16 %v2820, %v2819
    %v2939 = vpack.c.b16 %v2822, %v2821
    %v2940 = vpack.c.b16 %v2824, %v2823
    %v2941 = vpack.c.b16 %v2826, %v2825
    %v2942 = vpack.c.b16 %v2828, %v2827
    %v2943 = vpack.c.b16 %v2830, %v2829
    %v2944 = vpack.c.b16 %v2832, %v2831
    %v2945 = vpack.c.b16 %v2834, %v2833
    %v2946 = vpack.c.b16 %v2836, %v2835
    %v2947 = vpack.c.b16 %v2838, %v2837
    %v2948 = vpack.c.b16 %v2840, %v2839
    %v2949 = vpack.c.b16 %v2842, %v2841
    %v2950 = vpack.c.b16 %v2844, %v2843
    %v2951 = vpack.c.b16 %v2846, %v2845
    %v2952 = vpack.c.b16 %v2848, %v2847
    %v2953 = vpack.c.b16 %v2850, %v2849
    %v2954 = vpack.c.b16 %v2852, %v2851
    %v2955 = vpack.c.b16 %v2854, %v2853
    %v2956 = vpack.c.b16 %v2856, %v2855
    %v2957 = vpack.c.b16 %v2858, %v2857
    %v2958 = vpack.c.b16 %v2860, %v2859
    %v2959 = vpack.c.b16 %v2862, %v2861
    %v2960 = vpack.c.b16 %v2864, %v2863
    %v2961 = vpack.c.b16 %v2866, %v2865
    %v2962 = vpack.c.b16 %v2868, %v2867
    %v2963 = vpack.c.b16 %v2870, %v2869
    %v2964 = vpack.c.b16 %v2872, %v2871
    %v2965 = vpack.c.b16 %v2874, %v2873
    %v2966 = vpack.c.b16 %v2876, %v2875
    %v2967 = vpack.c.b16 %v2878, %v2877
    %v2968 = vpack.c.b16 %v2880, %v2879
    %v2969 = vpack.c.b16 %v2882, %v2881
    %v2970 = vpack.c.b16 %v2884, %v2883
    %v2971 = vpack.c.b16 %v2886, %v2885
    %v2972 = vpack.c.b16 %v2888, %v2887
    %v2973 = vpack.c.b16 %v2890, %v2889
    %v2974 = vpack.c.b16 %v2892, %v2891
    %v2975 = vpack.c.b16 %v2894, %v2893
    %v2976 = vpack.c.b16 %v2896, %v2895
    %v2977 = vpack.c.b16 %v2898, %v2897
    %v2978 = vpack.c.b16 %v2900, %v2899
    %v2979 = vpack.c.b16 %v2902, %v2901
    %v2980 = vpack.c.b16 %v2904, %v2903
    %v2981 = vpack.c.b16 %v2906, %v2905
    %v2982 = vpack.c.b16 %v2908, %v2907
    %v2983 = vpack.c.b16 %v2910, %v2909
    %v2984 = vpack.c.b16 %v2912, %v2911
    %v2985 = vpack.c.b16 %v2914, %v2913
    %v2986 = vpack.c.b16 %v2916, %v2915
    %v2987 = vpack.c.b16 %v2918, %v2917
    %v2988 = vpack.c.b16 %v2920, %v2919
    %v2989 = vpack.c.b16 %v2922, %v2921
    %v2990 = vpack.c.b16 %v2924, %v2923
    %v2991 = vpack.c.b16 %v2926, %v2925
    %v2992 = vpack.c.b16 %v2928, %v2927
    %3057 = vmatprep.subr.bf16.mxu0 0
    %3058 = vmatpush1.bf16.msra.mxu0 %v2936
    %3059 = vmatprep.subr.bf16.mxu0 0
    %3060 = vmatpush1.bf16.msra.mxu0 %v2935
    %3061 = vmatprep.subr.bf16.mxu0 0
    %3062 = vmatpush1.bf16.msra.mxu0 %v2934
    %3063 = vmatprep.subr.bf16.mxu0 0
    %3064 = vmatpush1.bf16.msra.mxu0 %v2933
    %3065 = vmatprep.subr.bf16.mxu0 0
    %3066 = vmatpush1.bf16.msra.mxu0 %v2932
    %3067 = vmatprep.subr.bf16.mxu0 0
    %3068 = vmatpush1.bf16.msra.mxu0 %v2931
    %3069 = vmatprep.subr.bf16.mxu0 0
    %3070 = vmatpush1.bf16.msra.mxu0 %v2930
    %3071 = vmatprep.subr.bf16.mxu0 0
    %3072 = vmatpush1.bf16.msra.mxu0 %v2929
    %3073 = vmatprep.subr.bf16.mxu0 0
    %3074 = vmatpush2.bf16.msra.mxu0 %v2944
    %3075 = vmatprep.subr.bf16.mxu0 0
    %3076 = vmatpush2.bf16.msra.mxu0 %v2943
    %3077 = vmatprep.subr.bf16.mxu0 0
    %3078 = vmatpush2.bf16.msra.mxu0 %v2942
    %3079 = vmatprep.subr.bf16.mxu0 0
    %3080 = vmatpush2.bf16.msra.mxu0 %v2941
    %3081 = vmatprep.subr.bf16.mxu0 0
    %3082 = vmatpush2.bf16.msra.mxu0 %v2940
    %3083 = vmatprep.subr.bf16.mxu0 0
    %3084 = vmatpush2.bf16.msra.mxu0 %v2939
    %3085 = vmatprep.subr.bf16.mxu0 0
    %3086 = vmatpush2.bf16.msra.mxu0 %v2938
    %3087 = vmatprep.subr.bf16.mxu0 0
    %3088 = vmatpush2.bf16.msra.mxu0 %v2937
    %3089 = vmatprep.mubr.bf16.mxu0 %v2531
    %3090 = vmatmul.mubr.bf16.gmra.mxu0 %v2530
    %v3091 = vpop.f32.mrf.mxu0
    %v3092 = vadd.f32 %v2671, %v3091
    %v3093 = vpop.f32.mrf.mxu0
    %v3094 = vpop.f32.mrf.mxu0
    %v3095 = vpop.f32.mrf.mxu0
    %3096 = vdwg.mxu0
    %3097 = vmatprep.subr.bf16.mxu0 0
    %3098 = vmatpush1.bf16.msra.mxu0 %v2952
    %3099 = vmatprep.subr.bf16.mxu0 0
    %3100 = vmatpush1.bf16.msra.mxu0 %v2951
    %3101 = vmatprep.subr.bf16.mxu0 0
    %3102 = vmatpush1.bf16.msra.mxu0 %v2950
    %3103 = vmatprep.subr.bf16.mxu0 0
    %3104 = vmatpush1.bf16.msra.mxu0 %v2949
    %3105 = vmatprep.subr.bf16.mxu0 0
    %3106 = vmatpush1.bf16.msra.mxu0 %v2948
    %3107 = vmatprep.subr.bf16.mxu0 0
    %3108 = vmatpush1.bf16.msra.mxu0 %v2947
    %3109 = vmatprep.subr.bf16.mxu0 0
    %3110 = vmatpush1.bf16.msra.mxu0 %v2946
    %3111 = vmatprep.subr.bf16.mxu0 0
    %3112 = vmatpush1.bf16.msra.mxu0 %v2945
    %3113 = vmatprep.subr.bf16.mxu0 0
    %3114 = vmatpush2.bf16.msra.mxu0 %v2960
    %3115 = vmatprep.subr.bf16.mxu0 0
    %3116 = vmatpush2.bf16.msra.mxu0 %v2959
    %3117 = vmatprep.subr.bf16.mxu0 0
    %3118 = vmatpush2.bf16.msra.mxu0 %v2958
    %3119 = vmatprep.subr.bf16.mxu0 0
    %3120 = vmatpush2.bf16.msra.mxu0 %v2957
    %3121 = vmatprep.subr.bf16.mxu0 0
    %3122 = vmatpush2.bf16.msra.mxu0 %v2956
    %3123 = vmatprep.subr.bf16.mxu0 0
    %3124 = vmatpush2.bf16.msra.mxu0 %v2955
    %3125 = vmatprep.subr.bf16.mxu0 0
    %3126 = vmatpush2.bf16.msra.mxu0 %v2954
    %3127 = vmatprep.subr.bf16.mxu0 0
    %3128 = vmatpush2.bf16.msra.mxu0 %v2953
    %3129 = vmatprep.mubr.bf16.mxu0 %v2533
    %3130 = vmatmul.mubr.bf16.gmra.mxu0 %v2532
    %v3131 = vpop.f32.mrf.mxu0
    %v3132 = vadd.f32 %v3092, %v3131
    %v3133 = vpop.f32.mrf.mxu0
    %v3134 = vpop.f32.mrf.mxu0
    %v3135 = vpop.f32.mrf.mxu0
    %3136 = vdwg.mxu0
    %3137 = vmatprep.subr.bf16.mxu0 0
    %3138 = vmatpush1.bf16.msra.mxu0 %v2968
    %3139 = vmatprep.subr.bf16.mxu0 0
    %3140 = vmatpush1.bf16.msra.mxu0 %v2967
    %3141 = vmatprep.subr.bf16.mxu0 0
    %3142 = vmatpush1.bf16.msra.mxu0 %v2966
    %3143 = vmatprep.subr.bf16.mxu0 0
    %3144 = vmatpush1.bf16.msra.mxu0 %v2965
    %3145 = vmatprep.subr.bf16.mxu0 0
    %3146 = vmatpush1.bf16.msra.mxu0 %v2964
    %3147 = vmatprep.subr.bf16.mxu0 0
    %3148 = vmatpush1.bf16.msra.mxu0 %v2963
    %3149 = vmatprep.subr.bf16.mxu0 0
    %3150 = vmatpush1.bf16.msra.mxu0 %v2962
    %3151 = vmatprep.subr.bf16.mxu0 0
    %3152 = vmatpush1.bf16.msra.mxu0 %v2961
    %3153 = vmatprep.subr.bf16.mxu0 0
    %3154 = vmatpush2.bf16.msra.mxu0 %v2976
    %3155 = vmatprep.subr.bf16.mxu0 0
    %3156 = vmatpush2.bf16.msra.mxu0 %v2975
    %3157 = vmatprep.subr.bf16.mxu0 0
    %3158 = vmatpush2.bf16.msra.mxu0 %v2974
    %3159 = vmatprep.subr.bf16.mxu0 0
    %3160 = vmatpush2.bf16.msra.mxu0 %v2973
    %3161 = vmatprep.subr.bf16.mxu0 0
    %3162 = vmatpush2.bf16.msra.mxu0 %v2972
    %3163 = vmatprep.subr.bf16.mxu0 0
    %3164 = vmatpush2.bf16.msra.mxu0 %v2971
    %3165 = vmatprep.subr.bf16.mxu0 0
    %3166 = vmatpush2.bf16.msra.mxu0 %v2970
    %3167 = vmatprep.subr.bf16.mxu0 0
    %3168 = vmatpush2.bf16.msra.mxu0 %v2969
    %3169 = vmatprep.mubr.bf16.mxu0 %v2535
    %3170 = vmatmul.mubr.bf16.gmra.mxu0 %v2534
    %v3171 = vpop.f32.mrf.mxu0
    %v3172 = vadd.f32 %v3132, %v3171
    %v3173 = vpop.f32.mrf.mxu0
    %v3174 = vpop.f32.mrf.mxu0
    %v3175 = vpop.f32.mrf.mxu0
    %3176 = vdwg.mxu0
    %3177 = vmatprep.subr.bf16.mxu0 0
    %3178 = vmatpush1.bf16.msra.mxu0 %v2984
    %3179 = vmatprep.subr.bf16.mxu0 0
    %3180 = vmatpush1.bf16.msra.mxu0 %v2983
    %3181 = vmatprep.subr.bf16.mxu0 0
    %3182 = vmatpush1.bf16.msra.mxu0 %v2982
    %3183 = vmatprep.subr.bf16.mxu0 0
    %3184 = vmatpush1.bf16.msra.mxu0 %v2981
    %3185 = vmatprep.subr.bf16.mxu0 0
    %3186 = vmatpush1.bf16.msra.mxu0 %v2980
    %3187 = vmatprep.subr.bf16.mxu0 0
    %3188 = vmatpush1.bf16.msra.mxu0 %v2979
    %3189 = vmatprep.subr.bf16.mxu0 0
    %3190 = vmatpush1.bf16.msra.mxu0 %v2978
    %3191 = vmatprep.subr.bf16.mxu0 0
    %3192 = vmatpush1.bf16.msra.mxu0 %v2977
    %3193 = vmatprep.subr.bf16.mxu0 0
    %3194 = vmatpush2.bf16.msra.mxu0 %v2992
    %3195 = vmatprep.subr.bf16.mxu0 0
    %3196 = vmatpush2.bf16.msra.mxu0 %v2991
    %3197 = vmatprep.subr.bf16.mxu0 0
    %3198 = vmatpush2.bf16.msra.mxu0 %v2990
    %3199 = vmatprep.subr.bf16.mxu0 0
    %3200 = vmatpush2.bf16.msra.mxu0 %v2989
    %3201 = vmatprep.subr.bf16.mxu0 0
    %3202 = vmatpush2.bf16.msra.mxu0 %v2988
    %3203 = vmatprep.subr.bf16.mxu0 0
    %3204 = vmatpush2.bf16.msra.mxu0 %v2987
    %3205 = vmatprep.subr.bf16.mxu0 0
    %3206 = vmatpush2.bf16.msra.mxu0 %v2986
    %3207 = vmatprep.subr.bf16.mxu0 0
    %3208 = vmatpush2.bf16.msra.mxu0 %v2985
    %3209 = vmatprep.mubr.bf16.mxu0 %v2537
    %3210 = vmatmul.mubr.bf16.gmra.mxu0 %v2536
    %v3211 = vpop.f32.mrf.mxu0
    %v3212 = vadd.f32 %v3172, %v3211
    %v3213 = vpop.f32.mrf.mxu0
    %v3214 = vpop.f32.mrf.mxu0
    %v3215 = vpop.f32.mrf.mxu0
    %3216 = vdwg.mxu0
    %3217 = vmax.xlane.f32.xlu0 %v3212
    %v3218 = vpop.xlane.xlu0 %3217
    %v3219 = vsub.f32 %v3212, %v3218
    %v3220 = vmul.f32 %v3219, 1.442695
    %v3221 = vpow.pop %v3220
    %3222 = vadd.xlane.f32.xlu0 %v3221
    %v3223 = vpop.xlane.xlu0 %3222
    %v3224 = vlog2.pop %v3223
    %v3225 = vmul.f32 %v3224, 0.6931472
    %v3226 = vsub.f32 %v3219, %v3225
    %3227 = vst [vmem:[%s8] sm:$0xff] %v3226
    // Predicated region
    $region42: #{graph_classifier_forward.2} parent=1 // pred_check
      _
    $region43: #{graph_classifier_forward.2} parent=1 // pred_check_branch
      %3229 = sbr.rel (0) target = $region45
    $region44: #{graph_classifier_forward.2} parent=1 // pred_region
      _
    $region45: #{graph_classifier_forward.2} parent=1 // pred_fallthru
      _
    // Predicated region
    $region46: #{graph_classifier_forward.2} parent=1 // pred_check
      _
    $region47: #{graph_classifier_forward.2} parent=1 // pred_check_branch
      %3231 = sbr.rel (0) target = $region49
    $region48: #{graph_classifier_forward.2} parent=1 // pred_region
      _
    $region49: #{graph_classifier_forward.2} parent=1 // pred_fallthru
      _
    %3232 = vsyncpa [#allocation8], 1
    %3233 = vsyncpa [#allocation10], 1

</llo_original>
